<compile_context>
chip_gen: v7x
topology: tpu7x:2x2x1
jax: 0.10.0
libtpu: 0.0.40
codegen_flags: <defaults>
</compile_context>

<pallas_src>
import functools

import jax
import jax.numpy as jnp
from jax.experimental import pallas as pl
from jax.experimental.pallas import tpu as pltpu


def _round_up(x, m):
    return (x + m - 1) // m * m


# ----------------------------------------------------------------------------
# Pallas kernel: BT batch elements per grid step, whole forward pass fused.
# ----------------------------------------------------------------------------
def _msfn_kernel(S, C, Ci, BT, Fpad, Q0, W0, P0,
                 x_ref, w_ref, b_ref, out_ref):
    threeS = 3 * S
    P = S // 2

    # --- fused block-diagonal encoder matmul (biases folded via ones cols) ---
    # TODO(synk): encoder1/2/3 are external modules with unspecified
    # architecture; modeled deterministically as per-timestep Linear + tanh.
    w_enc = w_ref[0:Fpad, 0:C]                                    # (Fpad, C) bf16
    xe = jnp.dot(x_ref[...], w_enc, preferred_element_type=jnp.float32)
    xe = jnp.tanh(xe)                                             # (M, C) f32
    x = jnp.where(xe >= 0, xe, 0.1 * xe)                          # leaky_relu(., 0.1)

    # --- NONLocalBlock2D: fused theta|phi|g 1x1 convs (one wide matmul) ------
    w_qkv = w_ref[Q0:Q0 + C, 0:3 * Ci]                            # (C, 3Ci) bf16
    qkv = jnp.dot(x.astype(jnp.bfloat16), w_qkv,
                  preferred_element_type=jnp.float32) + b_ref[0:1, 0:3 * Ci]
    qkv3 = qkv.reshape(BT, threeS, 3 * Ci)                        # per-batch view
    theta = qkv3[:, :, 0:Ci].astype(jnp.bfloat16)                 # (BT, 3S, Ci)
    phi = qkv3[:, :, Ci:2 * Ci]
    g = qkv3[:, :, 2 * Ci:3 * Ci]

    # nn.MaxPool2d((2, 2)) over the (H=S, W=3) grid.  With the host-side
    # per-batch row order [w][h-even | h-odd], both reductions are contiguous
    # middle-dim slices + VPU max (no reshape, no strided gather).
    def pool2x2(t):
        t01 = jnp.maximum(t[:, 0:S, :], t[:, S:2 * S, :])         # w in {0, 1}
        return jnp.maximum(t01[:, 0:P, :], t01[:, P:2 * P, :])    # h pairs

    phi_p = pool2x2(phi).astype(jnp.bfloat16)                     # (BT, P, Ci)
    g_p = pool2x2(g).astype(jnp.bfloat16)

    # f = theta @ phi^T, softmax over the sub-sampled key axis.
    f = jnp.einsum('bnd,bpd->bnp', theta, phi_p,
                   preferred_element_type=jnp.float32)            # (BT, 3S, P)
    f = f - jnp.max(f, axis=-1, keepdims=True)
    ef = jnp.exp(f)
    f_div_c = ef * pl.reciprocal(jnp.sum(ef, axis=-1, keepdims=True), approx=True)

    y = jnp.einsum('bnp,bpd->bnd', f_div_c.astype(jnp.bfloat16), g_p,
                   preferred_element_type=jnp.float32)            # (BT, 3S, Ci)

    # W (1x1 conv) fused with eval-mode BatchNorm2d affine, residual, relu.
    w_w = w_ref[W0:W0 + Ci, 0:C]                                  # (Ci, C) bf16
    wy = jnp.dot(y.reshape(BT * threeS, Ci).astype(jnp.bfloat16), w_w,
                 preferred_element_type=jnp.float32) + b_ref[1:2, 0:C]
    z = jnp.maximum(wy + x, 0.0)                                  # (M, C) f32

    # AdaptiveMaxPool2d((1, 1)) per batch element + projector Linear(C, 1).
    # TODO(synk): Dropout is modeled in eval mode (identity).
    pooled = jnp.max(z.reshape(BT, threeS, C), axis=1)            # (BT, C)
    w_proj = w_ref[P0:P0 + C, 0:1]                                # (C, 1) bf16
    res = jnp.dot(pooled.astype(jnp.bfloat16), w_proj,
                  preferred_element_type=jnp.float32) + b_ref[2:3, 0:1]
    # Lane-dense unmasked store; the wrapper reads lane 0.
    out_ref[...] = jnp.broadcast_to(res, (BT, 128))


# ----------------------------------------------------------------------------
# Wrapper: host-side slab packing + pallas_call with a 2-step parallel grid.
# ----------------------------------------------------------------------------
def msfn_forward(x1, x2, x3, p, n_grid=2):
    B, S, F1 = x1.shape
    F2, F3 = x2.shape[-1], x3.shape[-1]
    C = p['enc1_w'].shape[1]
    Ci = p['wt'].shape[1]
    assert S % 2 == 0, "MaxPool2d((2,2)) requires an even sequence length"
    assert 3 * Ci <= 128 and C <= 128, "slab lane packing assumes C, 3*Ci <= 128"

    NG = n_grid if (B % n_grid == 0 and B >= n_grid) else 1
    BT = B // NG
    threeS = 3 * S
    M = BT * threeS
    Fcat = F1 + F2 + F3
    Fpad = _round_up(Fcat + 3, 16)        # block-diag features + 3 bias cols

    # --- input slab: (B, 3S, Fpad), w-major rows, even/odd-h ordering --------
    perm = jnp.concatenate([jnp.arange(0, S, 2), jnp.arange(1, S, 2)])
    slab = jnp.zeros((B, threeS, Fpad), jnp.float32)
    offs = (0, F1, F1 + F2)
    for w, (xw, off) in enumerate(zip((x1, x2, x3), offs)):
        rows = slice(w * S, (w + 1) * S)
        slab = slab.at[:, rows, off:off + xw.shape[-1]].set(xw[:, perm, :])
        slab = slab.at[:, rows, Fcat + w].set(1.0)       # folds encoder bias
    x_slab = slab.reshape(NG, M, Fpad).astype(jnp.bfloat16)

    # --- weight slab (bf16) and bias slab (f32), carved in-kernel ------------
    Q0 = Fpad
    W0 = Q0 + _round_up(C, 16)
    P0 = W0 + _round_up(Ci, 16)
    R = P0 + _round_up(C, 16)
    wslab = jnp.zeros((R, 128), jnp.float32)
    wslab = wslab.at[0:F1, 0:C].set(p['enc1_w'])                 # block-diag enc
    wslab = wslab.at[F1:F1 + F2, 0:C].set(p['enc2_w'])
    wslab = wslab.at[F1 + F2:Fcat, 0:C].set(p['enc3_w'])
    wslab = wslab.at[Fcat + 0, 0:C].set(p['enc1_b'])             # bias rows
    wslab = wslab.at[Fcat + 1, 0:C].set(p['enc2_b'])
    wslab = wslab.at[Fcat + 2, 0:C].set(p['enc3_b'])
    wslab = wslab.at[Q0:Q0 + C, 0:Ci].set(p['wt'])               # theta|phi|g
    wslab = wslab.at[Q0:Q0 + C, Ci:2 * Ci].set(p['wp'])
    wslab = wslab.at[Q0:Q0 + C, 2 * Ci:3 * Ci].set(p['wg'])
    wslab = wslab.at[W0:W0 + Ci, 0:C].set(p['ww_eff'])           # W conv + BN
    wslab = wslab.at[P0:P0 + C, 0:1].set(p['wproj'])             # projector
    wslab = wslab.astype(jnp.bfloat16)

    bslab = jnp.zeros((8, 128), jnp.float32)
    bslab = bslab.at[0, 0:3 * Ci].set(
        jnp.concatenate([p['bt'][0], p['bp'][0], p['bg'][0]]))
    bslab = bslab.at[1, 0:C].set(p['bw_eff'][0])
    bslab = bslab.at[2, 0:1].set(p['bproj'][0])

    kernel = functools.partial(_msfn_kernel, S, C, Ci, BT, Fpad, Q0, W0, P0)
    out = pl.pallas_call(
        kernel,
        out_shape=jax.ShapeDtypeStruct((NG, BT, 128), jnp.float32),
        grid=(NG,),
        in_specs=[
            pl.BlockSpec((None, M, Fpad), lambda g: (g, 0, 0)),
            pl.BlockSpec(wslab.shape, lambda g: (0, 0)),
            pl.BlockSpec(bslab.shape, lambda g: (0, 0)),
        ],
        out_specs=pl.BlockSpec((None, BT, 128), lambda g: (g, 0, 0)),
        compiler_params=pltpu.CompilerParams(
            dimension_semantics=("parallel",)),
    )(x_slab, wslab, bslab)
    return out[:, :, 0].reshape(B, 1)


# ----------------------------------------------------------------------------
# Pure-JAX f32 reference (original h-major layout) for a sanity check.
# ----------------------------------------------------------------------------
def msfn_reference(x1, x2, x3, p):
    B, S, _ = x1.shape
    C = p['enc1_w'].shape[1]
    Ci = p['wt'].shape[1]
    P = S // 2
    e1 = jnp.tanh(x1 @ p['enc1_w'] + p['enc1_b'])
    e2 = jnp.tanh(x2 @ p['enc2_w'] + p['enc2_b'])
    e3 = jnp.tanh(x3 @ p['enc3_w'] + p['enc3_b'])
    x = jnp.stack([e1, e2, e3], axis=2)                  # (B, S, 3, C)
    x = jnp.where(x >= 0, x, 0.1 * x)
    theta = x @ p['wt'] + p['bt']
    phi = x @ p['wp'] + p['bp']
    g = x @ p['wg'] + p['bg']

    def pool2x2(t):                                      # (B, S, 3, Ci) -> (B, P, Ci)
        t = jnp.max(t[:, :, :2, :], axis=2)
        return jnp.max(t.reshape(B, P, 2, Ci), axis=2)

    phi_p, g_p = pool2x2(phi), pool2x2(g)
    tq = theta.reshape(B, S * 3, Ci)
    f = jnp.einsum('bnd,bpd->bnp', tq, phi_p)
    f = jax.nn.softmax(f, axis=-1)
    y = jnp.einsum('bnp,bpd->bnd', f, g_p)
    xf = x.reshape(B, S * 3, C)
    z = jnp.maximum(y @ p['ww_eff'] + p['bw_eff'] + xf, 0.0)
    pooled = jnp.max(z, axis=1)
    return pooled @ p['wproj'] + p['bproj']


# ----------------------------------------------------------------------------
# Deterministic parameter initialization
# ----------------------------------------------------------------------------
def init_params(key, F1, F2, F3, C, Ci):
    keys = jax.random.split(key, 20)

    def w(k, shape, scale=0.1):
        return (scale * jax.random.normal(k, shape)).astype(jnp.float32)

    p = {}
    # encoders (feature -> hidden)
    p['enc1_w'] = w(keys[0], (F1, C)); p['enc1_b'] = w(keys[1], (C,))
    p['enc2_w'] = w(keys[2], (F2, C)); p['enc2_b'] = w(keys[3], (C,))
    p['enc3_w'] = w(keys[4], (F3, C)); p['enc3_b'] = w(keys[5], (C,))
    # NONLocalBlock2D 1x1 convs, stored pre-transposed for right-multiplication.
    p['wt'] = w(keys[6], (C, Ci)); p['bt'] = w(keys[7], (1, Ci))
    p['wp'] = w(keys[8], (C, Ci)); p['bp'] = w(keys[9], (1, Ci))
    p['wg'] = w(keys[10], (C, Ci)); p['bg'] = w(keys[11], (1, Ci))
    # W conv (Ci -> C) fused with eval-mode BatchNorm2d(C).
    # NOTE: the original code zero-inits the BN scale/bias (block starts as
    # identity); random values keep the attention path non-degenerate here.
    conv_w = w(keys[12], (C, Ci))                        # (out, in)
    conv_b = w(keys[13], (C,))
    gamma = (1.0 + 0.1 * jax.random.normal(keys[14], (C,))).astype(jnp.float32)
    beta = w(keys[15], (C,))
    run_mean = jnp.zeros((C,), jnp.float32)
    run_var = jnp.ones((C,), jnp.float32)
    s = gamma / jnp.sqrt(run_var + 1e-5)
    p['ww_eff'] = (conv_w * s[:, None]).T                # (Ci, C)
    p['bw_eff'] = (s * (conv_b - run_mean) + beta).reshape(1, C)
    # projector Linear(n_hidden, 1)
    p['wproj'] = w(keys[16], (C, 1))
    p['bproj'] = w(keys[17], (1, 1))
    return p


if __name__ == "__main__":
    B, S = 8, 8                 # batch, sequence length (H of the non-local "image")
    F1, F2, F3 = 10, 12, 14     # per-scale input feature dims
    C = Ci = 32                 # n_hidden = inter_channels

    key = jax.random.PRNGKey(0)
    k1, k2, k3, kp = jax.random.split(key, 4)
    x1 = jax.random.normal(k1, (B, S, F1), dtype=jnp.float32)
    x2 = jax.random.normal(k2, (B, S, F2), dtype=jnp.float32)
    x3 = jax.random.normal(k3, (B, S, F3), dtype=jnp.float32)
    params = init_params(kp, F1, F2, F3, C, Ci)

    out = jax.block_until_ready(jax.jit(msfn_forward)(x1, x2, x3, params))
    ref = jax.block_until_ready(msfn_reference(x1, x2, x3, params))

    assert out.shape == (B, 1), out.shape
    # Tolerance covers bf16 MXU operands (encoder/qkv/attention/W/proj) plus
    # the EUP approx reciprocal in softmax, vs the pure-f32 reference.
    assert jnp.allclose(out, ref, rtol=3e-2, atol=3e-2), (out, ref)
    print("KERNEL_OK")
</pallas_src>

<mosaic_0001>
module attributes {stable_mosaic.version = 11 : i64} {
  func.func @_msfn_kernel(%arg0: i32, %arg1: memref<1x96x48xbf16, #tpu.memory_space<vmem>>, %arg2: memref<144x128xbf16, #tpu.memory_space<vmem>>, %arg3: memref<8x128xf32, #tpu.memory_space<vmem>>, %arg4: memref<1x4x128xf32, #tpu.memory_space<vmem>>) attributes {dimension_semantics = [#tpu.dimension_semantics<parallel>], iteration_bounds = array<i64: 2>, scalar_prefetch = 0 : i64, scratch_operands = 0 : i64, tpu.core_type = #tpu.core_type<tc>, window_params = [{transform_indices = @transform_0, window_bounds = array<i64: 1, 96, 48>}, {pipeline_mode = #tpu.pipeline_mode<synchronous>, transform_indices = @transform_1, window_bounds = array<i64: 144, 128>}, {pipeline_mode = #tpu.pipeline_mode<synchronous>, transform_indices = @transform_2, window_bounds = array<i64: 8, 128>}, {transform_indices = @transform_3, window_bounds = array<i64: 1, 4, 128>}]} {
    %c0 = arith.constant 0 : index
    %c0_0 = arith.constant 0 : index
    %0 = vector.load %arg2[%c0, %c0_0] : memref<144x128xbf16, #tpu.memory_space<vmem>>, vector<48x32xbf16>
    %c0_1 = arith.constant 0 : index
    %c0_2 = arith.constant 0 : index
    %c0_3 = arith.constant 0 : index
    %1 = vector.load %arg1[%c0_1, %c0_2, %c0_3] : memref<1x96x48xbf16, #tpu.memory_space<vmem>>, vector<1x96x48xbf16>
    %2 = vector.shape_cast %1 : vector<1x96x48xbf16> to vector<96x48xbf16>
    %cst = arith.constant dense<0.000000e+00> : vector<96x32xf32>
    %3 = tpu.matmul %2, %0, %cst {dimension_numbers = #tpu.dot_dimension_numbers<[1], [0], [0], [1], [0, 0, 1, 1], [], []>} : vector<96x48xbf16>, vector<48x32xbf16>, vector<96x32xf32> -> vector<96x32xf32>
    %4 = math.tanh %3 : vector<96x32xf32>
    %cst_4 = arith.constant 0.000000e+00 : f32
    %5 = vector.broadcast %cst_4 : f32 to vector<96x32xf32>
    %6 = arith.cmpf oge, %4, %5 : vector<96x32xf32>
    %cst_5 = arith.constant 1.000000e-01 : f32
    %7 = vector.broadcast %cst_5 : f32 to vector<96x32xf32>
    %8 = arith.mulf %7, %4 : vector<96x32xf32>
    %9 = arith.select %6, %4, %8 : vector<96x32xi1>, vector<96x32xf32>
    %c48 = arith.constant 48 : index
    %c0_6 = arith.constant 0 : index
    %10 = vector.load %arg2[%c48, %c0_6] : memref<144x128xbf16, #tpu.memory_space<vmem>>, vector<32x96xbf16>
    %11 = arith.truncf %9 : vector<96x32xf32> to vector<96x32xbf16>
    %cst_7 = arith.constant dense<0.000000e+00> : vector<96x96xf32>
    %12 = tpu.matmul %11, %10, %cst_7 {dimension_numbers = #tpu.dot_dimension_numbers<[1], [0], [0], [1], [0, 0, 1, 1], [], []>} : vector<96x32xbf16>, vector<32x96xbf16>, vector<96x96xf32> -> vector<96x96xf32>
    %c0_8 = arith.constant 0 : index
    %c0_9 = arith.constant 0 : index
    %13 = vector.load %arg3[%c0_8, %c0_9] : memref<8x128xf32, #tpu.memory_space<vmem>>, vector<1x96xf32>
    %14 = vector.broadcast %13 : vector<1x96xf32> to vector<96x96xf32>
    %15 = arith.addf %12, %14 : vector<96x96xf32>
    %16 = vector.shape_cast %15 : vector<96x96xf32> to vector<4x24x96xf32>
    %17 = vector.extract_strided_slice %16 {offsets = [0, 0, 0], sizes = [4, 24, 32], strides = [1, 1, 1]} : vector<4x24x96xf32> to vector<4x24x32xf32>
    %18 = arith.truncf %17 : vector<4x24x32xf32> to vector<4x24x32xbf16>
    %19 = vector.extract_strided_slice %16 {offsets = [0, 0, 32], sizes = [4, 24, 32], strides = [1, 1, 1]} : vector<4x24x96xf32> to vector<4x24x32xf32>
    %20 = vector.extract_strided_slice %16 {offsets = [0, 0, 64], sizes = [4, 24, 32], strides = [1, 1, 1]} : vector<4x24x96xf32> to vector<4x24x32xf32>
    %21 = vector.extract_strided_slice %19 {offsets = [0, 0, 0], sizes = [4, 8, 32], strides = [1, 1, 1]} : vector<4x24x32xf32> to vector<4x8x32xf32>
    %22 = vector.extract_strided_slice %19 {offsets = [0, 8, 0], sizes = [4, 8, 32], strides = [1, 1, 1]} : vector<4x24x32xf32> to vector<4x8x32xf32>
    %23 = arith.maximumf %21, %22 : vector<4x8x32xf32>
    %24 = vector.extract_strided_slice %23 {offsets = [0, 0, 0], sizes = [4, 4, 32], strides = [1, 1, 1]} : vector<4x8x32xf32> to vector<4x4x32xf32>
    %25 = vector.extract_strided_slice %23 {offsets = [0, 4, 0], sizes = [4, 4, 32], strides = [1, 1, 1]} : vector<4x8x32xf32> to vector<4x4x32xf32>
    %26 = arith.maximumf %24, %25 : vector<4x4x32xf32>
    %27 = arith.truncf %26 : vector<4x4x32xf32> to vector<4x4x32xbf16>
    %28 = vector.extract_strided_slice %20 {offsets = [0, 0, 0], sizes = [4, 8, 32], strides = [1, 1, 1]} : vector<4x24x32xf32> to vector<4x8x32xf32>
    %29 = vector.extract_strided_slice %20 {offsets = [0, 8, 0], sizes = [4, 8, 32], strides = [1, 1, 1]} : vector<4x24x32xf32> to vector<4x8x32xf32>
    %30 = arith.maximumf %28, %29 : vector<4x8x32xf32>
    %31 = vector.extract_strided_slice %30 {offsets = [0, 0, 0], sizes = [4, 4, 32], strides = [1, 1, 1]} : vector<4x8x32xf32> to vector<4x4x32xf32>
    %32 = vector.extract_strided_slice %30 {offsets = [0, 4, 0], sizes = [4, 4, 32], strides = [1, 1, 1]} : vector<4x8x32xf32> to vector<4x4x32xf32>
    %33 = arith.maximumf %31, %32 : vector<4x4x32xf32>
    %34 = arith.truncf %33 : vector<4x4x32xf32> to vector<4x4x32xbf16>
    "tpu.trace_start"() <{level = 10 : i32, message = "bnd,bpd->bnp"}> : () -> ()
    %cst_10 = arith.constant dense<0.000000e+00> : vector<4x24x4xf32>
    %35 = tpu.matmul %18, %27, %cst_10 {dimension_numbers = #tpu.dot_dimension_numbers<[2], [2], [1], [1], [0, 0, 0, 1, 1, 1], [0], [0]>} : vector<4x24x32xbf16>, vector<4x4x32xbf16>, vector<4x24x4xf32> -> vector<4x24x4xf32>
    "tpu.trace_stop"() : () -> ()
    %cst_11 = arith.constant dense<0xFF800000> : vector<4x24xf32>
    %36 = vector.multi_reduction <maximumf>, %35, %cst_11 [2] : vector<4x24x4xf32> to vector<4x24xf32>
    %37 = vector.shape_cast %36 : vector<4x24xf32> to vector<4x24x1xf32>
    %38 = vector.broadcast %37 : vector<4x24x1xf32> to vector<4x24x4xf32>
    %39 = arith.subf %35, %38 : vector<4x24x4xf32>
    %40 = math.exp %39 : vector<4x24x4xf32>
    %cst_12 = arith.constant dense<0.000000e+00> : vector<4x24xf32>
    %41 = vector.multi_reduction <add>, %40, %cst_12 [2] : vector<4x24x4xf32> to vector<4x24xf32>
    %42 = vector.shape_cast %41 : vector<4x24xf32> to vector<4x24x1xf32>
    %43 = tpu.reciprocal %42 {approx = true} : vector<4x24x1xf32> -> vector<4x24x1xf32>
    %44 = vector.broadcast %43 : vector<4x24x1xf32> to vector<4x24x4xf32>
    %45 = arith.mulf %40, %44 : vector<4x24x4xf32>
    %46 = arith.truncf %45 : vector<4x24x4xf32> to vector<4x24x4xbf16>
    "tpu.trace_start"() <{level = 10 : i32, message = "bnp,bpd->bnd"}> : () -> ()
    %cst_13 = arith.constant dense<0.000000e+00> : vector<4x24x32xf32>
    %47 = tpu.matmul %46, %34, %cst_13 {dimension_numbers = #tpu.dot_dimension_numbers<[2], [1], [1], [2], [0, 0, 0, 1, 1, 2], [0], [0]>} : vector<4x24x4xbf16>, vector<4x4x32xbf16>, vector<4x24x32xf32> -> vector<4x24x32xf32>
    "tpu.trace_stop"() : () -> ()
    %c80 = arith.constant 80 : index
    %c0_14 = arith.constant 0 : index
    %48 = vector.load %arg2[%c80, %c0_14] : memref<144x128xbf16, #tpu.memory_space<vmem>>, vector<32x32xbf16>
    %49 = vector.shape_cast %47 : vector<4x24x32xf32> to vector<96x32xf32>
    %50 = arith.truncf %49 : vector<96x32xf32> to vector<96x32xbf16>
    %cst_15 = arith.constant dense<0.000000e+00> : vector<96x32xf32>
    %51 = tpu.matmul %50, %48, %cst_15 {dimension_numbers = #tpu.dot_dimension_numbers<[1], [0], [0], [1], [0, 0, 1, 1], [], []>} : vector<96x32xbf16>, vector<32x32xbf16>, vector<96x32xf32> -> vector<96x32xf32>
    %c1 = arith.constant 1 : index
    %c0_16 = arith.constant 0 : index
    %52 = vector.load %arg3[%c1, %c0_16] : memref<8x128xf32, #tpu.memory_space<vmem>>, vector<1x32xf32>
    %53 = vector.broadcast %52 : vector<1x32xf32> to vector<96x32xf32>
    %54 = arith.addf %51, %53 : vector<96x32xf32>
    %55 = arith.addf %54, %9 : vector<96x32xf32>
    %cst_17 = arith.constant 0.000000e+00 : f32
    %56 = vector.broadcast %cst_17 : f32 to vector<96x32xf32>
    %57 = arith.maximumf %55, %56 : vector<96x32xf32>
    %58 = vector.shape_cast %57 : vector<96x32xf32> to vector<4x24x32xf32>
    %cst_18 = arith.constant dense<0xFF800000> : vector<4x32xf32>
    %59 = vector.multi_reduction <maximumf>, %58, %cst_18 [1] : vector<4x24x32xf32> to vector<4x32xf32>
    %c112 = arith.constant 112 : index
    %c0_19 = arith.constant 0 : index
    %60 = vector.load %arg2[%c112, %c0_19] : memref<144x128xbf16, #tpu.memory_space<vmem>>, vector<32x1xbf16>
    %61 = arith.truncf %59 : vector<4x32xf32> to vector<4x32xbf16>
    %cst_20 = arith.constant dense<0.000000e+00> : vector<4x1xf32>
    %62 = tpu.matmul %61, %60, %cst_20 {dimension_numbers = #tpu.dot_dimension_numbers<[1], [0], [0], [1], [0, 0, 1, 1], [], []>} : vector<4x32xbf16>, vector<32x1xbf16>, vector<4x1xf32> -> vector<4x1xf32>
    %c2 = arith.constant 2 : index
    %c0_21 = arith.constant 0 : index
    %63 = vector.load %arg3[%c2, %c0_21] : memref<8x128xf32, #tpu.memory_space<vmem>>, vector<1x1xf32>
    %64 = vector.broadcast %63 : vector<1x1xf32> to vector<4x1xf32>
    %65 = arith.addf %62, %64 : vector<4x1xf32>
    %66 = vector.shape_cast %65 : vector<4x1xf32> to vector<4x1xf32>
    %67 = vector.broadcast %66 : vector<4x1xf32> to vector<4x128xf32>
    %c0_22 = arith.constant 0 : index
    %c0_23 = arith.constant 0 : index
    %c0_24 = arith.constant 0 : index
    %68 = vector.load %arg4[%c0_22, %c0_23, %c0_24] : memref<1x4x128xf32, #tpu.memory_space<vmem>>, vector<1x4x128xf32>
    %69 = vector.shape_cast %68 : vector<1x4x128xf32> to vector<4x128xf32>
    %70 = vector.shape_cast %67 : vector<4x128xf32> to vector<1x4x128xf32>
    tpu.vector_store %arg4[%c0_22, %c0_23, %c0_24], %70 {strides = array<i32>} : memref<1x4x128xf32, #tpu.memory_space<vmem>>, vector<1x4x128xf32>,
    return
  }
  func.func @transform_0(%arg0: i32) -> (i32, i32, i32) {
    %c0_i32 = arith.constant 0 : i32
    %c0_i32_0 = arith.constant 0 : i32
    %c0_i32_1 = arith.constant 0 : i32
    return %arg0, %c0_i32, %c0_i32_0 : i32, i32, i32
  }
  func.func @transform_1(%arg0: i32) -> (i32, i32) {
    %c0_i32 = arith.constant 0 : i32
    %c0_i32_0 = arith.constant 0 : i32
    %c0_i32_1 = arith.constant 0 : i32
    return %c0_i32, %c0_i32_0 : i32, i32
  }
  func.func @transform_2(%arg0: i32) -> (i32, i32) {
    %c0_i32 = arith.constant 0 : i32
    %c0_i32_0 = arith.constant 0 : i32
    %c0_i32_1 = arith.constant 0 : i32
    return %c0_i32, %c0_i32_0 : i32, i32
  }
  func.func @transform_3(%arg0: i32) -> (i32, i32, i32) {
    %c0_i32 = arith.constant 0 : i32
    %c0_i32_0 = arith.constant 0 : i32
    %c0_i32_1 = arith.constant 0 : i32
    return %arg0, %c0_i32, %c0_i32_0 : i32, i32, i32
  }
}

</mosaic_0001>

<llo_original>
// kernel: squeeze.11
$region0: #{squeeze.11}
  %s0 = inlined_call_operand.vmem [shape: f32[2,4], index: 0, kind: input, shape index: {}]
  %s1 = inlined_call_operand.hbm [shape: f32[8,1], index: 1, kind: output, shape index: {}]
  $region1: #{squeeze.11} parent=0
    #allocation0 [shape = 'u8[512]{0}', space=vmem, size = 0x400, scoped, tag = 'operand span for operand 1']
    #allocation1 [shape = 's32[1]{0}', space=sflag, size = 0x4, scoped, tag = 'scoped memory for squeeze.11']
    #allocation2 [shape = 'u8[4096]{0}', space=vmem, size = 0x1000, scoped, tag = 'scoped mem for output reshape']
    #allocation3 [shape = 'u8[4096]{0}', space=vmem, size = 0x1000, scoped, tag = 'scoped mem for input reshape']
    %2 = vsyncpa [#allocation1], 0
    %s4 = sshllo.u32 0, 2
    %v5 = vld [vmem:[%s0] sm:%s4]
    %6 = vst [vmem:[#allocation3] sm:%s4] %v5
    %v7 = vld [vmem:[#allocation3] sm:$0x1]
    %vm8 = vcmask 31744
    %9 = vst.msk [vmem:[#allocation2] sm:$0x1] %vm8, %v7
    %s10 = scalar_lea.vmem [#allocation3], 1
    %v11 = vld [vmem:[%s10] sm:$0x1]
    %12 = vrot.lane.b32.xlu0 %v11, 4
    %v13 = vpop.permute.xlu0 %12
    %vm14 = vcmask 64544
    %15 = vst.msk [vmem:[#allocation2] sm:$0x1] %vm14, %v13
    %s17 = sshllo.u32 0, 1
    %v19 = vld [vmem:[#allocation2] sm:%s17]
    %s20 = sshllo.u32 0, 1
    %21 = vst [vmem:[#allocation0] sm:%s20] %v19
    %s23 = ssub.s32 16, 16
    %24 = vsyncadd [#allocation1], %s23
    %s26 = sshll.u32 [#allocation0], 4
    %s27 = int_to_ptr.vmem [resolvable:$true] %s26
    %29 = dma.vmem_to_hbm [thread:$0]  %s27, 16, %s1, [#allocation1]
    %30 = dma.done [#allocation1], 16
    %31 = vsyncpa [#allocation1], 1

// kernel: msfn_forward.1
$region0: #{msfn_forward.1}
  #allocation0 [shape = 'u32[]', space=smem, size = 0x4, offset = 0x4, fixed_abs, tag = 'smem constant byte address 0x4 - core index']
  #allocation1 [shape = 'u32[144,128]{1,0:T(1,128)}', space=vmem, size = 0x12000, scoped, tag = 'internal scratch']
  %s0 = inlined_call_operand.vmem [shape: bf16[2,96,48], index: 0, kind: input, shape index: {}]
  %s1 = inlined_call_operand.vmem [shape: bf16[144,128], index: 1, kind: input, shape index: {}]
  %s2 = inlined_call_operand.vmem [shape: f32[8,128], index: 2, kind: input, shape index: {}]
  %s3 = inlined_call_operand.vmem [shape: f32[2,4,128], index: 3, kind: output, shape index: {}]
  %s4 = sld [smem:[#allocation0]]
  $region45: #{msfn_forward.1} parent=0
    _
  %s6 = ssub.s32 1, %s4
  %s7 = scalar_select 0, %s6, %s4
  loop: start=0, step=1, limit=4
  $region2: #{msfn_forward.1} parent=0 // loop_pre_header
    _
  $region3: #{msfn_forward.1} parent=0 // loop_header
    %s9 = sphi 0, %s13
    %p10 = scmp.ge.s32.totalorder %s9, 4
    %s19 = sphi 0, %s21
    %s22 = sphi 0, %s19
    %s23 = sphi 0, %s22
    %s39 = sphi 0, %s23
    %s43 = sphi 0, %s43
    %s45 = sphi 0, %s43
    %s46 = sphi 0, %s45
    %s60 = sphi 0, %s46
    %s64 = sphi 0, %s64
    %s66 = sphi 0, %s64
    %s67 = sphi 0, %s66
    %s81 = sphi 0, %s67
    %s87 = sphi 0, %s89
    %s90 = sphi 0, %s87
    %s91 = sphi 0, %s90
    %s107 = sphi 0, %s91
  $region4: #{msfn_forward.1} parent=0 // loop_header_branch
    %12 = sbr.rel (%p10) target = $region8
  $region5: #{msfn_forward.1} parent=0 // loop_body
    %s14 = ssub.s32 %s9, 1
    %s15 = ssub.s32 %s9, 2
    %s16 = sadd.s32 %s9, 1
    %s17 = ssub.s32 %s9, %s16
    %p18 = scmp.eq.s32.totalorder %s17, 0
    %s20 = sadd.s32 %s19, 1
    %s21 = scalar_select %p18, %s19, %s20
    %p24 = pneg %p18
    %p25 = scmp.eq.s32.totalorder %s9, 1
    %p26 = por %p24, %p25
    %p27 = scmp.ne.s32.totalorder %s19, %s22
    %p28 = scmp.eq.s32.totalorder %s9, 0
    %p29 = por %p27, %p28
    %p30 = scmp.ne.s32.totalorder %s19, %s22
    %p31 = scmp.eq.s32.totalorder %s14, 1
    %p32 = por %p30, %p31
    %p33 = scmp.ne.s32.totalorder %s22, %s23
    %p34 = scmp.eq.s32.totalorder %s14, 0
    %p35 = por %p33, %p34
    %p36 = scmp.ne.s32.totalorder %s22, %s23
    %p37 = scmp.eq.s32.totalorder %s15, 1
    %p38 = por %p36, %p37
    %p40 = scmp.ne.s32.totalorder %s23, %s39
    %p41 = scmp.eq.s32.totalorder %s15, 0
    %p42 = por %p40, %p41
    %s44 = sadd.s32 %s43, 1
    %p47 = scmp.eq.s32.totalorder %s9, 1
    %p48 = scmp.ne.s32.totalorder %s43, %s45
    %p49 = scmp.eq.s32.totalorder %s9, 0
    %p50 = por %p48, %p49
    %p51 = scmp.ne.s32.totalorder %s43, %s45
    %p52 = scmp.eq.s32.totalorder %s14, 1
    %p53 = por %p51, %p52
    %p54 = scmp.ne.s32.totalorder %s45, %s46
    %p55 = scmp.eq.s32.totalorder %s14, 0
    %p56 = por %p54, %p55
    %p57 = scmp.ne.s32.totalorder %s45, %s46
    %p58 = scmp.eq.s32.totalorder %s15, 1
    %p59 = por %p57, %p58
    %p61 = scmp.ne.s32.totalorder %s46, %s60
    %p62 = scmp.eq.s32.totalorder %s15, 0
    %p63 = por %p61, %p62
    %s65 = sadd.s32 %s64, 1
    %p68 = scmp.eq.s32.totalorder %s9, 1
    %p69 = scmp.ne.s32.totalorder %s64, %s66
    %p70 = scmp.eq.s32.totalorder %s9, 0
    %p71 = por %p69, %p70
    %p72 = scmp.ne.s32.totalorder %s64, %s66
    %p73 = scmp.eq.s32.totalorder %s14, 1
    %p74 = por %p72, %p73
    %p75 = scmp.ne.s32.totalorder %s66, %s67
    %p76 = scmp.eq.s32.totalorder %s14, 0
    %p77 = por %p75, %p76
    %p78 = scmp.ne.s32.totalorder %s66, %s67
    %p79 = scmp.eq.s32.totalorder %s15, 1
    %p80 = por %p78, %p79
    %p82 = scmp.ne.s32.totalorder %s67, %s81
    %p83 = scmp.eq.s32.totalorder %s15, 0
    %p84 = por %p82, %p83
    %s85 = ssub.s32 %s9, %s16
    %p86 = scmp.eq.s32.totalorder %s85, 0
    %s88 = sadd.s32 %s87, 1
    %s89 = scalar_select %p86, %s87, %s88
    %p92 = pneg %p86
    %p93 = scmp.eq.s32.totalorder %s9, 1
    %p94 = por %p92, %p93
    %p95 = scmp.ne.s32.totalorder %s87, %s90
    %p96 = scmp.eq.s32.totalorder %s9, 0
    %p97 = por %p95, %p96
    %p98 = scmp.ne.s32.totalorder %s87, %s90
    %p99 = scmp.eq.s32.totalorder %s14, 1
    %p100 = por %p98, %p99
    %p101 = scmp.ne.s32.totalorder %s90, %s91
    %p102 = scmp.eq.s32.totalorder %s14, 0
    %p103 = por %p101, %p102
    %p104 = scmp.ne.s32.totalorder %s90, %s91
    %p105 = scmp.eq.s32.totalorder %s15, 1
    %p106 = por %p104, %p105
    %p108 = scmp.ne.s32.totalorder %s91, %s107
    %p109 = scmp.eq.s32.totalorder %s15, 0
    %p110 = por %p108, %p109
    %p111 = scmp.le.s32.totalorder 1, %s9
    %p112 = scmp.lt.s32.totalorder %s9, 3
    %p113 = pnand %p111, %p112
    %p114 = pneg %p113
    // Predicated region
    $region9: #{msfn_forward.1} parent=5 // pred_check
      _
    $region10: #{msfn_forward.1} parent=5 // pred_check_branch
      %116 = sbr.rel (%p113) target = $region12
    $region11: #{msfn_forward.1} parent=5 // pred_region
      %s117 = ssub.s32 %s9, 1
      // Predicated region
      $region13: #{msfn_forward.1} parent=11 // pred_check
        %p118 = pneg %p56
      $region14: #{msfn_forward.1} parent=11 // pred_check_branch
        %120 = sbr.rel (%p118) target = $region16
      $region15: #{msfn_forward.1} parent=11 // pred_region
        _
      $region16: #{msfn_forward.1} parent=11 // pred_fallthru
        _
      // Predicated region
      $region17: #{msfn_forward.1} parent=11 // pred_check
        %p121 = pneg %p77
      $region18: #{msfn_forward.1} parent=11 // pred_check_branch
        %123 = sbr.rel (%p121) target = $region20
      $region19: #{msfn_forward.1} parent=11 // pred_region
        _
      $region20: #{msfn_forward.1} parent=11 // pred_fallthru
        _
    $region12: #{msfn_forward.1} parent=5 // pred_fallthru
      _
    %p124 = scmp.lt.s32.totalorder %s9, 2
    // Predicated region
    $region21: #{msfn_forward.1} parent=5 // pred_check
      %p125 = pneg %p124
    $region22: #{msfn_forward.1} parent=5 // pred_check_branch
      %127 = sbr.rel (%p125) target = $region24
    $region23: #{msfn_forward.1} parent=5 // pred_region
      // Predicated region
      $region25: #{msfn_forward.1} parent=23 // pred_check
        %p128 = pneg %p29
      $region26: #{msfn_forward.1} parent=23 // pred_check_branch
        %130 = sbr.rel (%p128) target = $region28
      $region27: #{msfn_forward.1} parent=23 // pred_region
        %p131 = scmp.lt.s32.totalorder %s9, 1
        %s132 = scalar_select %p131, %s9, 1
        %s133 = smul.addr %s132, 12
        %s134 = smul.addr %s133, 4
        %s135 = scalar_lea.vmem %s0, %s134
      $region28: #{msfn_forward.1} parent=23 // pred_fallthru
        _
    $region24: #{msfn_forward.1} parent=5 // pred_fallthru
      _
    %p136 = scmp.le.s32.totalorder 1, %s9
    %p137 = scmp.lt.s32.totalorder %s9, 3
    %p138 = pnand %p136, %p137
    %p139 = pneg %p138
    // Predicated region
    $region29: #{msfn_forward.1} parent=5 // pred_check
      _
    $region30: #{msfn_forward.1} parent=5 // pred_check_branch
      %141 = sbr.rel (%p138) target = $region32
    $region31: #{msfn_forward.1} parent=5 // pred_region
      %s142 = ssub.s32 %s9, 1
      %p143 = scmp.lt.s32.totalorder %s14, 1
      %s144 = scalar_select %p143, %s14, 1
      %s145 = smul.addr %s144, 12
      %s146 = smul.addr %s145, 4
      %s147 = scalar_lea.vmem %s0, %s146
      %p148 = pneg %p35
      %p149 = pneg %p32
      %p150 = pneg %p56
      %p151 = pneg %p53
      %p152 = pneg %p77
      %p153 = pneg %p74
      %p154 = pneg %p103
      %p155 = pneg %p100
      %p156 = scmp.lt.s32.totalorder %s14, 1
      %s157 = scalar_select %p156, %s14, 1
      %s158 = smul.addr %s157, 4
      %s159 = scalar_lea.vmem %s3, %s158
      %p160 = scmp.lt.s32.totalorder %s14, 1
      %s161 = scalar_select %p160, %s14, 1
      %s162 = smul.addr %s161, 12
      %s163 = smul.addr %s162, 4
      %s164 = scalar_lea.vmem %s0, %s163
      %p165 = scmp.lt.s32.totalorder %s14, 1
      %s166 = scalar_select %p165, %s14, 1
      %s167 = smul.addr %s166, 4
      %s168 = scalar_lea.vmem %s3, %s167
      %v170 = vld [vmem:[%s1] sm:$0xf]
      %v171 = vld [vmem:[%s1 + $0x4] sm:$0xf]
      %v172 = vld [vmem:[%s1 + $0x8] sm:$0xf]
      %v173 = vld [vmem:[%s1 + $0xc] sm:$0xf]
      %v174 = vld [vmem:[%s1 + $0x10] sm:$0xf]
      %v175 = vld [vmem:[%s1 + $0x14] sm:$0xf]
      %v176 = vld [vmem:[%s164] sm:$0xf]
      %v177 = vld [vmem:[%s164 + $0x4] sm:$0xf]
      %v178 = vld [vmem:[%s164 + $0x8] sm:$0xf]
      %v179 = vld [vmem:[%s164 + $0xc] sm:$0xf]
      %v180 = vld [vmem:[%s164 + $0x10] sm:$0xf]
      %v181 = vld [vmem:[%s164 + $0x14] sm:$0xf]
      %v182 = vld [vmem:[%s164 + $0x18] sm:$0xf]
      %v183 = vld [vmem:[%s164 + $0x1c] sm:$0xf]
      %v184 = vld [vmem:[%s164 + $0x20] sm:$0xf]
      %v185 = vld [vmem:[%s164 + $0x24] sm:$0xf]
      %v186 = vld [vmem:[%s164 + $0x28] sm:$0xf]
      %v187 = vld [vmem:[%s164 + $0x2c] sm:$0xf]
      %v200 = vunpack.c.l.b16 %v176
      %v201 = vunpack.c.l.b16 %v177
      %v202 = vunpack.c.l.b16 %v178
      %v203 = vunpack.c.l.b16 %v179
      %v204 = vunpack.c.l.b16 %v180
      %v205 = vunpack.c.l.b16 %v181
      %v206 = vunpack.c.l.b16 %v182
      %v207 = vunpack.c.l.b16 %v183
      %v208 = vunpack.c.l.b16 %v184
      %v209 = vunpack.c.l.b16 %v185
      %v210 = vunpack.c.l.b16 %v186
      %v211 = vunpack.c.l.b16 %v187
      %v212 = vpack.c.b16 %v201, %v200
      %v213 = vpack.c.b16 %v203, %v202
      %v214 = vpack.c.b16 %v205, %v204
      %v215 = vpack.c.b16 %v207, %v206
      %v216 = vpack.c.b16 %v209, %v208
      %v217 = vpack.c.b16 %v211, %v210
      %v224 = vunpack.c.l.b16 %v170
      %v225 = vunpack.c.l.b16 %v171
      %v226 = vunpack.c.l.b16 %v172
      %v227 = vunpack.c.l.b16 %v173
      %v228 = vunpack.c.l.b16 %v174
      %v229 = vunpack.c.l.b16 %v175
      %v230 = vpack.c.b16 %v225, %v224
      %v231 = vpack.c.b16 %v227, %v226
      %v232 = vpack.c.b16 %v229, %v228
      %vm236 = vcmask 392192
      %v238 = vsel %vm236, %v212, 0
      %v241 = vsel %vm236, %v213, 0
      %v244 = vsel %vm236, %v214, 0
      %v247 = vsel %vm236, %v215, 0
      %v250 = vsel %vm236, %v216, 0
      %v253 = vsel %vm236, %v217, 0
      %255 = vmatprep.subr.bf16.mxu0 0
      %256 = vmatpush1.bf16.msra.mxu0 %v230
      %257 = vmatprep.subr.bf16.mxu0 0
      %258 = vmatpush1.bf16.msra.mxu0 %v231
      %259 = vmatprep.subr.bf16.mxu0 0
      %260 = vmatpush1.bf16.msra.mxu0 %v232
      %261 = vmatprep.subr.bf16.mxu0 0
      %262 = vmatpush1.bf16.msra.mxu0 0
      %263 = vmatprep.subr.bf16.mxu0 0
      %264 = vmatpush1.bf16.msra.mxu0 0
      %265 = vmatprep.subr.bf16.mxu0 0
      %266 = vmatpush1.bf16.msra.mxu0 0
      %267 = vmatprep.subr.bf16.mxu0 0
      %268 = vmatpush1.bf16.msra.mxu0 0
      %269 = vmatprep.subr.bf16.mxu0 0
      %270 = vmatpush1.bf16.msra.mxu0 0
      %271 = vmatprep.subr.bf16.mxu0 0
      %272 = vmatpush1.bf16.msra.mxu0 0
      %273 = vmatprep.subr.bf16.mxu0 0
      %274 = vmatpush1.bf16.msra.mxu0 0
      %275 = vmatprep.subr.bf16.mxu0 0
      %276 = vmatpush1.bf16.msra.mxu0 0
      %277 = vmatprep.subr.bf16.mxu0 0
      %278 = vmatpush1.bf16.msra.mxu0 0
      %279 = vmatprep.subr.bf16.mxu0 0
      %280 = vmatpush1.bf16.msra.mxu0 0
      %281 = vmatprep.subr.bf16.mxu0 0
      %282 = vmatpush1.bf16.msra.mxu0 0
      %283 = vmatprep.subr.bf16.mxu0 0
      %284 = vmatpush1.bf16.msra.mxu0 0
      %285 = vmatprep.subr.bf16.mxu0 0
      %286 = vmatpush1.bf16.msra.mxu0 0
      %287 = vmatprep.mubr.bf16.mxu0 0
      %288 = vmatmul.mubr.bf16.gmra.mrb[0].mxu0 %v238
      %v289 = vpop.f32.mrb[0].mxu0
      %v290 = vadd.f32 0.0, %v289
      %v291 = vpop.f32.mrb[0].mxu0
      %v292 = vpop.f32.mrb[0].mxu0
      %v293 = vadd.f32 0.0, %v292
      %v294 = vpop.f32.mrb[0].mxu0
      %295 = vmatprep.mubr.bf16.mxu0 0
      %296 = vmatmul.mubr.bf16.gmra.mrb[0].mxu0 %v241
      %v297 = vpop.f32.mrb[0].mxu0
      %v298 = vadd.f32 0.0, %v297
      %v299 = vpop.f32.mrb[0].mxu0
      %v300 = vpop.f32.mrb[0].mxu0
      %v301 = vadd.f32 0.0, %v300
      %v302 = vpop.f32.mrb[0].mxu0
      %303 = vmatprep.mubr.bf16.mxu0 0
      %304 = vmatmul.mubr.bf16.gmra.mrb[0].mxu0 %v244
      %v305 = vpop.f32.mrb[0].mxu0
      %v306 = vadd.f32 0.0, %v305
      %v307 = vpop.f32.mrb[0].mxu0
      %v308 = vpop.f32.mrb[0].mxu0
      %v309 = vadd.f32 0.0, %v308
      %v310 = vpop.f32.mrb[0].mxu0
      %311 = vmatprep.mubr.bf16.mxu0 0
      %312 = vmatmul.mubr.bf16.gmra.mrb[0].mxu0 %v247
      %v313 = vpop.f32.mrb[0].mxu0
      %v314 = vadd.f32 0.0, %v313
      %v315 = vpop.f32.mrb[0].mxu0
      %v316 = vpop.f32.mrb[0].mxu0
      %v317 = vadd.f32 0.0, %v316
      %v318 = vpop.f32.mrb[0].mxu0
      %319 = vmatprep.mubr.bf16.mxu0 0
      %320 = vmatmul.mubr.bf16.gmra.mrb[0].mxu0 %v250
      %v321 = vpop.f32.mrb[0].mxu0
      %v322 = vadd.f32 0.0, %v321
      %v323 = vpop.f32.mrb[0].mxu0
      %v324 = vpop.f32.mrb[0].mxu0
      %v325 = vadd.f32 0.0, %v324
      %v326 = vpop.f32.mrb[0].mxu0
      %327 = vmatprep.mubr.bf16.mxu0 0
      %328 = vmatmul.mubr.bf16.gmra.mrb[0].mxu0 %v253
      %v329 = vpop.f32.mrb[0].mxu0
      %v330 = vadd.f32 0.0, %v329
      %v331 = vpop.f32.mrb[0].mxu0
      %v332 = vpop.f32.mrb[0].mxu0
      %v333 = vadd.f32 0.0, %v332
      %v334 = vpop.f32.mrb[0].mxu0
      %335 = vdwg.mxu0
      %v336 = vtanh.pop %v290
      %v337 = vtanh.pop %v293
      %v338 = vtanh.pop %v298
      %v339 = vtanh.pop %v301
      %v340 = vtanh.pop %v306
      %v341 = vtanh.pop %v309
      %v342 = vtanh.pop %v314
      %v343 = vtanh.pop %v317
      %v344 = vtanh.pop %v322
      %v345 = vtanh.pop %v325
      %v346 = vtanh.pop %v330
      %v347 = vtanh.pop %v333
      %vm348 = vcmp.ge.f32.partialorder %v336, 0.0
      %vm349 = vcmp.ge.f32.partialorder %v337, 0.0
      %vm350 = vcmp.ge.f32.partialorder %v338, 0.0
      %vm351 = vcmp.ge.f32.partialorder %v339, 0.0
      %vm352 = vcmp.ge.f32.partialorder %v340, 0.0
      %vm353 = vcmp.ge.f32.partialorder %v341, 0.0
      %vm354 = vcmp.ge.f32.partialorder %v342, 0.0
      %vm355 = vcmp.ge.f32.partialorder %v343, 0.0
      %vm356 = vcmp.ge.f32.partialorder %v344, 0.0
      %vm357 = vcmp.ge.f32.partialorder %v345, 0.0
      %vm358 = vcmp.ge.f32.partialorder %v346, 0.0
      %vm359 = vcmp.ge.f32.partialorder %v347, 0.0
      %v360 = vmul.f32 %v336, 0.1
      %v361 = vmul.f32 %v337, 0.1
      %v362 = vmul.f32 %v338, 0.1
      %v363 = vmul.f32 %v339, 0.1
      %v364 = vmul.f32 %v340, 0.1
      %v365 = vmul.f32 %v341, 0.1
      %v366 = vmul.f32 %v342, 0.1
      %v367 = vmul.f32 %v343, 0.1
      %v368 = vmul.f32 %v344, 0.1
      %v369 = vmul.f32 %v345, 0.1
      %v370 = vmul.f32 %v346, 0.1
      %v371 = vmul.f32 %v347, 0.1
      %v372 = vsel %vm348, %v336, %v360
      %v373 = vsel %vm349, %v337, %v361
      %v374 = vsel %vm350, %v338, %v362
      %v375 = vsel %vm351, %v339, %v363
      %v376 = vsel %vm352, %v340, %v364
      %v377 = vsel %vm353, %v341, %v365
      %v378 = vsel %vm354, %v342, %v366
      %v379 = vsel %vm355, %v343, %v367
      %v380 = vsel %vm356, %v344, %v368
      %v381 = vsel %vm357, %v345, %v369
      %v382 = vsel %vm358, %v346, %v370
      %v383 = vsel %vm359, %v347, %v371
      %v384 = vld [vmem:[%s1 + $0x18] sm:$0xf]
      %v385 = vld [vmem:[%s1 + $0x1c] sm:$0xf]
      %v386 = vld [vmem:[%s1 + $0x20] sm:$0xf]
      %v387 = vld [vmem:[%s1 + $0x24] sm:$0xf]
      %v388 = vpack.c.bf16 %v373, %v372
      %v389 = vpack.c.bf16 %v375, %v374
      %v390 = vpack.c.bf16 %v377, %v376
      %v391 = vpack.c.bf16 %v379, %v378
      %v392 = vpack.c.bf16 %v381, %v380
      %v393 = vpack.c.bf16 %v383, %v382
      %v394 = vld [vmem:[%s2] sm:$0x1]
      %v395 = vlaneseq
      %v396 = vshrl.u32 %v395, 7
      %v397 = vsub.s32 0, %v396
      %v398 = vrot.slane %v394, %v397
      %v403 = vunpack.c.l.b16 %v384
      %v404 = vunpack.c.l.b16 %v385
      %v405 = vunpack.c.l.b16 %v386
      %v406 = vunpack.c.l.b16 %v387
      %v407 = vpack.c.b16 %v404, %v403
      %v408 = vpack.c.b16 %v406, %v405
      %vm411 = vcmask 261120
      %v413 = vsel %vm411, %v388, 0
      %v416 = vsel %vm411, %v389, 0
      %v419 = vsel %vm411, %v390, 0
      %v422 = vsel %vm411, %v391, 0
      %v425 = vsel %vm411, %v392, 0
      %v428 = vsel %vm411, %v393, 0
      %430 = vmatprep.subr.bf16.mxu0 0
      %431 = vmatpush1.bf16.msra.mxu0 %v407
      %432 = vmatprep.subr.bf16.mxu0 0
      %433 = vmatpush1.bf16.msra.mxu0 %v408
      %434 = vmatprep.subr.bf16.mxu0 0
      %435 = vmatpush1.bf16.msra.mxu0 0
      %436 = vmatprep.subr.bf16.mxu0 0
      %437 = vmatpush1.bf16.msra.mxu0 0
      %438 = vmatprep.subr.bf16.mxu0 0
      %439 = vmatpush1.bf16.msra.mxu0 0
      %440 = vmatprep.subr.bf16.mxu0 0
      %441 = vmatpush1.bf16.msra.mxu0 0
      %442 = vmatprep.subr.bf16.mxu0 0
      %443 = vmatpush1.bf16.msra.mxu0 0
      %444 = vmatprep.subr.bf16.mxu0 0
      %445 = vmatpush1.bf16.msra.mxu0 0
      %446 = vmatprep.subr.bf16.mxu0 0
      %447 = vmatpush1.bf16.msra.mxu0 0
      %448 = vmatprep.subr.bf16.mxu0 0
      %449 = vmatpush1.bf16.msra.mxu0 0
      %450 = vmatprep.subr.bf16.mxu0 0
      %451 = vmatpush1.bf16.msra.mxu0 0
      %452 = vmatprep.subr.bf16.mxu0 0
      %453 = vmatpush1.bf16.msra.mxu0 0
      %454 = vmatprep.subr.bf16.mxu0 0
      %455 = vmatpush1.bf16.msra.mxu0 0
      %456 = vmatprep.subr.bf16.mxu0 0
      %457 = vmatpush1.bf16.msra.mxu0 0
      %458 = vmatprep.subr.bf16.mxu0 0
      %459 = vmatpush1.bf16.msra.mxu0 0
      %460 = vmatprep.subr.bf16.mxu0 0
      %461 = vmatpush1.bf16.msra.mxu0 0
      %462 = vmatprep.mubr.bf16.mxu0 0
      %463 = vmatmul.mubr.bf16.gmra.mrb[0].mxu0 %v413
      %v464 = vpop.f32.mrb[0].mxu0
      %v465 = vadd.f32 %v398, %v464
      %v466 = vpop.f32.mrb[0].mxu0
      %v467 = vpop.f32.mrb[0].mxu0
      %v468 = vadd.f32 %v398, %v467
      %v469 = vpop.f32.mrb[0].mxu0
      %470 = vmatprep.mubr.bf16.mxu0 0
      %471 = vmatmul.mubr.bf16.gmra.mrb[0].mxu0 %v416
      %v472 = vpop.f32.mrb[0].mxu0
      %v473 = vadd.f32 %v398, %v472
      %v474 = vpop.f32.mrb[0].mxu0
      %v475 = vpop.f32.mrb[0].mxu0
      %v476 = vadd.f32 %v398, %v475
      %v477 = vpop.f32.mrb[0].mxu0
      %478 = vmatprep.mubr.bf16.mxu0 0
      %479 = vmatmul.mubr.bf16.gmra.mrb[0].mxu0 %v419
      %v480 = vpop.f32.mrb[0].mxu0
      %v481 = vadd.f32 %v398, %v480
      %v482 = vpop.f32.mrb[0].mxu0
      %v483 = vpop.f32.mrb[0].mxu0
      %v484 = vadd.f32 %v398, %v483
      %v485 = vpop.f32.mrb[0].mxu0
      %486 = vmatprep.mubr.bf16.mxu0 0
      %487 = vmatmul.mubr.bf16.gmra.mrb[0].mxu0 %v422
      %v488 = vpop.f32.mrb[0].mxu0
      %v489 = vadd.f32 %v398, %v488
      %v490 = vpop.f32.mrb[0].mxu0
      %v491 = vpop.f32.mrb[0].mxu0
      %v492 = vadd.f32 %v398, %v491
      %v493 = vpop.f32.mrb[0].mxu0
      %494 = vmatprep.mubr.bf16.mxu0 0
      %495 = vmatmul.mubr.bf16.gmra.mrb[0].mxu0 %v425
      %v496 = vpop.f32.mrb[0].mxu0
      %v497 = vadd.f32 %v398, %v496
      %v498 = vpop.f32.mrb[0].mxu0
      %v499 = vpop.f32.mrb[0].mxu0
      %v500 = vadd.f32 %v398, %v499
      %v501 = vpop.f32.mrb[0].mxu0
      %502 = vmatprep.mubr.bf16.mxu0 0
      %503 = vmatmul.mubr.bf16.gmra.mrb[0].mxu0 %v428
      %v504 = vpop.f32.mrb[0].mxu0
      %v505 = vadd.f32 %v398, %v504
      %v506 = vpop.f32.mrb[0].mxu0
      %v507 = vpop.f32.mrb[0].mxu0
      %v508 = vadd.f32 %v398, %v507
      %v509 = vpop.f32.mrb[0].mxu0
      %510 = vdwg.mxu0
      %v511 = vpack.c.bf16 %v468, %v465
      %v512 = vpack.c.bf16 %v473, %v473
      %v513 = vpack.c.bf16 %v481, %v476
      %v514 = vpack.c.bf16 %v484, %v484
      %v515 = vpack.c.bf16 %v492, %v489
      %v516 = vpack.c.bf16 %v497, %v497
      %v517 = vpack.c.bf16 %v505, %v500
      %v518 = vpack.c.bf16 %v508, %v508
      %v519 = vmax.f32 %v465, %v468
      %v520 = vmax.f32 %v476, %v481
      %v521 = vmax.f32 %v489, %v492
      %v522 = vmax.f32 %v500, %v505
      %v527 = vrot.slane %v519, 4
      %v528 = vrot.slane %v520, 4
      %v529 = vrot.slane %v521, 4
      %v530 = vrot.slane %v522, 4
      %v535 = vmax.f32 %v519, %v527
      %v536 = vmax.f32 %v520, %v528
      %v537 = vmax.f32 %v521, %v529
      %v538 = vmax.f32 %v522, %v530
      %v539 = vpack.c.bf16 %v535, %v535
      %v540 = vpack.c.bf16 %v536, %v536
      %v541 = vpack.c.bf16 %v537, %v537
      %v542 = vpack.c.bf16 %v538, %v538
      %544 = vrot.lane.b32.xlu0 %v539, 96
      %v545 = vpop.permute.xlu0 %544
      %v547 = vsel %vm411, %v511, 0
      %v550 = vsel %vm411, %v512, 0
      %v553 = vsel %vm411, %v545, 0
      %555 = vmatprep.subr.bf16.mxu0 0
      %556 = vmatpush1.bf16.xpose.msra.mxu0 %v553
      %557 = vmatprep.subr.bf16.mxu0 0
      %558 = vmatpush1.bf16.xpose.msra.mxu0 0
      %559 = vmatprep.subr.bf16.mxu0 0
      %560 = vmatpush1.bf16.xpose.msra.mxu0 0
      %561 = vmatprep.subr.bf16.mxu0 0
      %562 = vmatpush1.bf16.xpose.msra.mxu0 0
      %563 = vmatprep.subr.bf16.mxu0 0
      %564 = vmatpush1.bf16.xpose.msra.mxu0 0
      %565 = vmatprep.subr.bf16.mxu0 0
      %566 = vmatpush1.bf16.xpose.msra.mxu0 0
      %567 = vmatprep.subr.bf16.mxu0 0
      %568 = vmatpush1.bf16.xpose.msra.mxu0 0
      %569 = vmatprep.subr.bf16.mxu0 0
      %570 = vmatpush1.bf16.xpose.msra.mxu0 0
      %571 = vmatprep.subr.bf16.mxu0 0
      %572 = vmatpush1.bf16.xpose.msra.mxu0 0
      %573 = vmatprep.subr.bf16.mxu0 0
      %574 = vmatpush1.bf16.xpose.msra.mxu0 0
      %575 = vmatprep.subr.bf16.mxu0 0
      %576 = vmatpush1.bf16.xpose.msra.mxu0 0
      %577 = vmatprep.subr.bf16.mxu0 0
      %578 = vmatpush1.bf16.xpose.msra.mxu0 0
      %579 = vmatprep.subr.bf16.mxu0 0
      %580 = vmatpush1.bf16.xpose.msra.mxu0 0
      %581 = vmatprep.subr.bf16.mxu0 0
      %582 = vmatpush1.bf16.xpose.msra.mxu0 0
      %583 = vmatprep.subr.bf16.mxu0 0
      %584 = vmatpush1.bf16.xpose.msra.mxu0 0
      %585 = vmatprep.subr.bf16.mxu0 0
      %586 = vmatpush1.bf16.xpose.msra.mxu0 0
      %587 = vmatprep.mubr.bf16.mxu0 0
      %588 = vmatmul.mubr.bf16.gmra.mrb[0].mxu0 %v547
      %v589 = vpop.f32.mrb[0].mxu0
      %v590 = vadd.f32 0.0, %v589
      %v591 = vpop.f32.mrb[0].mxu0
      %v592 = vpop.f32.mrb[0].mxu0
      %v593 = vadd.f32 0.0, %v592
      %v594 = vpop.f32.mrb[0].mxu0
      %595 = vmatprep.mubr.bf16.mxu0 0
      %596 = vmatmul.mubr.bf16.gmra.mrb[0].mxu0 %v550
      %v597 = vpop.f32.mrb[0].mxu0
      %v598 = vadd.f32 0.0, %v597
      %v599 = vpop.f32.mrb[0].mxu0
      %v600 = vpop.f32.mrb[0].mxu0
      %v601 = vpop.f32.mrb[0].mxu0
      %602 = vdwg.mxu0
      %604 = vrot.lane.b32.xlu0 %v540, 96
      %v605 = vpop.permute.xlu0 %604
      %v607 = vsel %vm411, %v513, 0
      %v610 = vsel %vm411, %v514, 0
      %v613 = vsel %vm411, %v605, 0
      %615 = vmatprep.subr.bf16.mxu0 0
      %616 = vmatpush1.bf16.xpose.msra.mxu0 %v613
      %617 = vmatprep.subr.bf16.mxu0 0
      %618 = vmatpush1.bf16.xpose.msra.mxu0 0
      %619 = vmatprep.subr.bf16.mxu0 0
      %620 = vmatpush1.bf16.xpose.msra.mxu0 0
      %621 = vmatprep.subr.bf16.mxu0 0
      %622 = vmatpush1.bf16.xpose.msra.mxu0 0
      %623 = vmatprep.subr.bf16.mxu0 0
      %624 = vmatpush1.bf16.xpose.msra.mxu0 0
      %625 = vmatprep.subr.bf16.mxu0 0
      %626 = vmatpush1.bf16.xpose.msra.mxu0 0
      %627 = vmatprep.subr.bf16.mxu0 0
      %628 = vmatpush1.bf16.xpose.msra.mxu0 0
      %629 = vmatprep.subr.bf16.mxu0 0
      %630 = vmatpush1.bf16.xpose.msra.mxu0 0
      %631 = vmatprep.subr.bf16.mxu0 0
      %632 = vmatpush1.bf16.xpose.msra.mxu0 0
      %633 = vmatprep.subr.bf16.mxu0 0
      %634 = vmatpush1.bf16.xpose.msra.mxu0 0
      %635 = vmatprep.subr.bf16.mxu0 0
      %636 = vmatpush1.bf16.xpose.msra.mxu0 0
      %637 = vmatprep.subr.bf16.mxu0 0
      %638 = vmatpush1.bf16.xpose.msra.mxu0 0
      %639 = vmatprep.subr.bf16.mxu0 0
      %640 = vmatpush1.bf16.xpose.msra.mxu0 0
      %641 = vmatprep.subr.bf16.mxu0 0
      %642 = vmatpush1.bf16.xpose.msra.mxu0 0
      %643 = vmatprep.subr.bf16.mxu0 0
      %644 = vmatpush1.bf16.xpose.msra.mxu0 0
      %645 = vmatprep.subr.bf16.mxu0 0
      %646 = vmatpush1.bf16.xpose.msra.mxu0 0
      %647 = vmatprep.mubr.bf16.mxu0 0
      %648 = vmatmul.mubr.bf16.gmra.mrb[0].mxu0 %v607
      %v649 = vpop.f32.mrb[0].mxu0
      %v650 = vadd.f32 0.0, %v649
      %v651 = vpop.f32.mrb[0].mxu0
      %v652 = vpop.f32.mrb[0].mxu0
      %v653 = vadd.f32 0.0, %v652
      %v654 = vpop.f32.mrb[0].mxu0
      %655 = vmatprep.mubr.bf16.mxu0 0
      %656 = vmatmul.mubr.bf16.gmra.mrb[0].mxu0 %v610
      %v657 = vpop.f32.mrb[0].mxu0
      %v658 = vadd.f32 0.0, %v657
      %v659 = vpop.f32.mrb[0].mxu0
      %v660 = vpop.f32.mrb[0].mxu0
      %v661 = vpop.f32.mrb[0].mxu0
      %662 = vdwg.mxu0
      %664 = vrot.lane.b32.xlu0 %v541, 96
      %v665 = vpop.permute.xlu0 %664
      %v667 = vsel %vm411, %v515, 0
      %v670 = vsel %vm411, %v516, 0
      %v673 = vsel %vm411, %v665, 0
      %675 = vmatprep.subr.bf16.mxu0 0
      %676 = vmatpush1.bf16.xpose.msra.mxu0 %v673
      %677 = vmatprep.subr.bf16.mxu0 0
      %678 = vmatpush1.bf16.xpose.msra.mxu0 0
      %679 = vmatprep.subr.bf16.mxu0 0
      %680 = vmatpush1.bf16.xpose.msra.mxu0 0
      %681 = vmatprep.subr.bf16.mxu0 0
      %682 = vmatpush1.bf16.xpose.msra.mxu0 0
      %683 = vmatprep.subr.bf16.mxu0 0
      %684 = vmatpush1.bf16.xpose.msra.mxu0 0
      %685 = vmatprep.subr.bf16.mxu0 0
      %686 = vmatpush1.bf16.xpose.msra.mxu0 0
      %687 = vmatprep.subr.bf16.mxu0 0
      %688 = vmatpush1.bf16.xpose.msra.mxu0 0
      %689 = vmatprep.subr.bf16.mxu0 0
      %690 = vmatpush1.bf16.xpose.msra.mxu0 0
      %691 = vmatprep.subr.bf16.mxu0 0
      %692 = vmatpush1.bf16.xpose.msra.mxu0 0
      %693 = vmatprep.subr.bf16.mxu0 0
      %694 = vmatpush1.bf16.xpose.msra.mxu0 0
      %695 = vmatprep.subr.bf16.mxu0 0
      %696 = vmatpush1.bf16.xpose.msra.mxu0 0
      %697 = vmatprep.subr.bf16.mxu0 0
      %698 = vmatpush1.bf16.xpose.msra.mxu0 0
      %699 = vmatprep.subr.bf16.mxu0 0
      %700 = vmatpush1.bf16.xpose.msra.mxu0 0
      %701 = vmatprep.subr.bf16.mxu0 0
      %702 = vmatpush1.bf16.xpose.msra.mxu0 0
      %703 = vmatprep.subr.bf16.mxu0 0
      %704 = vmatpush1.bf16.xpose.msra.mxu0 0
      %705 = vmatprep.subr.bf16.mxu0 0
      %706 = vmatpush1.bf16.xpose.msra.mxu0 0
      %707 = vmatprep.mubr.bf16.mxu0 0
      %708 = vmatmul.mubr.bf16.gmra.mrb[0].mxu0 %v667
      %v709 = vpop.f32.mrb[0].mxu0
      %v710 = vadd.f32 0.0, %v709
      %v711 = vpop.f32.mrb[0].mxu0
      %v712 = vpop.f32.mrb[0].mxu0
      %v713 = vadd.f32 0.0, %v712
      %v714 = vpop.f32.mrb[0].mxu0
      %715 = vmatprep.mubr.bf16.mxu0 0
      %716 = vmatmul.mubr.bf16.gmra.mrb[0].mxu0 %v670
      %v717 = vpop.f32.mrb[0].mxu0
      %v718 = vadd.f32 0.0, %v717
      %v719 = vpop.f32.mrb[0].mxu0
      %v720 = vpop.f32.mrb[0].mxu0
      %v721 = vpop.f32.mrb[0].mxu0
      %722 = vdwg.mxu0
      %724 = vrot.lane.b32.xlu0 %v542, 96
      %v725 = vpop.permute.xlu0 %724
      %v727 = vsel %vm411, %v517, 0
      %v730 = vsel %vm411, %v518, 0
      %v733 = vsel %vm411, %v725, 0
      %735 = vmatprep.subr.bf16.mxu0 0
      %736 = vmatpush1.bf16.xpose.msra.mxu0 %v733
      %737 = vmatprep.subr.bf16.mxu0 0
      %738 = vmatpush1.bf16.xpose.msra.mxu0 0
      %739 = vmatprep.subr.bf16.mxu0 0
      %740 = vmatpush1.bf16.xpose.msra.mxu0 0
      %741 = vmatprep.subr.bf16.mxu0 0
      %742 = vmatpush1.bf16.xpose.msra.mxu0 0
      %743 = vmatprep.subr.bf16.mxu0 0
      %744 = vmatpush1.bf16.xpose.msra.mxu0 0
      %745 = vmatprep.subr.bf16.mxu0 0
      %746 = vmatpush1.bf16.xpose.msra.mxu0 0
      %747 = vmatprep.subr.bf16.mxu0 0
      %748 = vmatpush1.bf16.xpose.msra.mxu0 0
      %749 = vmatprep.subr.bf16.mxu0 0
      %750 = vmatpush1.bf16.xpose.msra.mxu0 0
      %751 = vmatprep.subr.bf16.mxu0 0
      %752 = vmatpush1.bf16.xpose.msra.mxu0 0
      %753 = vmatprep.subr.bf16.mxu0 0
      %754 = vmatpush1.bf16.xpose.msra.mxu0 0
      %755 = vmatprep.subr.bf16.mxu0 0
      %756 = vmatpush1.bf16.xpose.msra.mxu0 0
      %757 = vmatprep.subr.bf16.mxu0 0
      %758 = vmatpush1.bf16.xpose.msra.mxu0 0
      %759 = vmatprep.subr.bf16.mxu0 0
      %760 = vmatpush1.bf16.xpose.msra.mxu0 0
      %761 = vmatprep.subr.bf16.mxu0 0
      %762 = vmatpush1.bf16.xpose.msra.mxu0 0
      %763 = vmatprep.subr.bf16.mxu0 0
      %764 = vmatpush1.bf16.xpose.msra.mxu0 0
      %765 = vmatprep.subr.bf16.mxu0 0
      %766 = vmatpush1.bf16.xpose.msra.mxu0 0
      %767 = vmatprep.mubr.bf16.mxu0 0
      %768 = vmatmul.mubr.bf16.gmra.mrb[0].mxu0 %v727
      %v769 = vpop.f32.mrb[0].mxu0
      %v770 = vadd.f32 0.0, %v769
      %v771 = vpop.f32.mrb[0].mxu0
      %v772 = vpop.f32.mrb[0].mxu0
      %v773 = vadd.f32 0.0, %v772
      %v774 = vpop.f32.mrb[0].mxu0
      %775 = vmatprep.mubr.bf16.mxu0 0
      %776 = vmatmul.mubr.bf16.gmra.mrb[0].mxu0 %v730
      %v777 = vpop.f32.mrb[0].mxu0
      %v778 = vadd.f32 0.0, %v777
      %v779 = vpop.f32.mrb[0].mxu0
      %v780 = vpop.f32.mrb[0].mxu0
      %v781 = vpop.f32.mrb[0].mxu0
      %782 = vdwg.mxu0
      %vm783 = vcmask 31744
      %v784 = vsel %vm783, %v590, -inf
      %785 = vmax.xlane.f32.xlu0 %v784
      %v786 = vpop.xlane.xlu0 %785
      %v787 = vsel %vm783, %v593, -inf
      %788 = vmax.xlane.f32.xlu0 %v787
      %v789 = vpop.xlane.xlu0 %788
      %v790 = vsel %vm783, %v598, -inf
      %791 = vmax.xlane.f32.xlu0 %v790
      %v792 = vpop.xlane.xlu0 %791
      %v793 = vsel %vm783, %v650, -inf
      %794 = vmax.xlane.f32.xlu0 %v793
      %v795 = vpop.xlane.xlu0 %794
      %v796 = vsel %vm783, %v653, -inf
      %797 = vmax.xlane.f32.xlu0 %v796
      %v798 = vpop.xlane.xlu0 %797
      %v799 = vsel %vm783, %v658, -inf
      %800 = vmax.xlane.f32.xlu0 %v799
      %v801 = vpop.xlane.xlu0 %800
      %v802 = vsel %vm783, %v710, -inf
      %803 = vmax.xlane.f32.xlu0 %v802
      %v804 = vpop.xlane.xlu0 %803
      %v805 = vsel %vm783, %v713, -inf
      %806 = vmax.xlane.f32.xlu0 %v805
      %v807 = vpop.xlane.xlu0 %806
      %v808 = vsel %vm783, %v718, -inf
      %809 = vmax.xlane.f32.xlu0 %v808
      %v810 = vpop.xlane.xlu0 %809
      %v811 = vsel %vm783, %v770, -inf
      %812 = vmax.xlane.f32.xlu0 %v811
      %v813 = vpop.xlane.xlu0 %812
      %v814 = vsel %vm783, %v773, -inf
      %815 = vmax.xlane.f32.xlu0 %v814
      %v816 = vpop.xlane.xlu0 %815
      %v817 = vsel %vm783, %v778, -inf
      %818 = vmax.xlane.f32.xlu0 %v817
      %v819 = vpop.xlane.xlu0 %818
      %v820 = vsub.f32 %v590, %v786
      %v821 = vsub.f32 %v593, %v789
      %v822 = vsub.f32 %v598, %v792
      %v823 = vsub.f32 %v650, %v795
      %v824 = vsub.f32 %v653, %v798
      %v825 = vsub.f32 %v658, %v801
      %v826 = vsub.f32 %v710, %v804
      %v827 = vsub.f32 %v713, %v807
      %v828 = vsub.f32 %v718, %v810
      %v829 = vsub.f32 %v770, %v813
      %v830 = vsub.f32 %v773, %v816
      %v831 = vsub.f32 %v778, %v819
      %v832 = vmul.f32 %v820, 1.442695
      %v833 = vpow.pop %v832
      %v834 = vmul.f32 %v821, 1.442695
      %v835 = vpow.pop %v834
      %v836 = vmul.f32 %v822, 1.442695
      %v837 = vpow.pop %v836
      %v838 = vmul.f32 %v823, 1.442695
      %v839 = vpow.pop %v838
      %v840 = vmul.f32 %v824, 1.442695
      %v841 = vpow.pop %v840
      %v842 = vmul.f32 %v825, 1.442695
      %v843 = vpow.pop %v842
      %v844 = vmul.f32 %v826, 1.442695
      %v845 = vpow.pop %v844
      %v846 = vmul.f32 %v827, 1.442695
      %v847 = vpow.pop %v846
      %v848 = vmul.f32 %v828, 1.442695
      %v849 = vpow.pop %v848
      %v850 = vmul.f32 %v829, 1.442695
      %v851 = vpow.pop %v850
      %v852 = vmul.f32 %v830, 1.442695
      %v853 = vpow.pop %v852
      %v854 = vmul.f32 %v831, 1.442695
      %v855 = vpow.pop %v854
      %v856 = vsel %vm783, %v833, 0.0
      %857 = vadd.xlane.f32.xlu0 %v856
      %v858 = vpop.xlane.xlu0 %857
      %v859 = vsel %vm783, %v835, 0.0
      %860 = vadd.xlane.f32.xlu0 %v859
      %v861 = vpop.xlane.xlu0 %860
      %v862 = vsel %vm783, %v837, 0.0
      %863 = vadd.xlane.f32.xlu0 %v862
      %v864 = vpop.xlane.xlu0 %863
      %v865 = vsel %vm783, %v839, 0.0
      %866 = vadd.xlane.f32.xlu0 %v865
      %v867 = vpop.xlane.xlu0 %866
      %v868 = vsel %vm783, %v841, 0.0
      %869 = vadd.xlane.f32.xlu0 %v868
      %v870 = vpop.xlane.xlu0 %869
      %v871 = vsel %vm783, %v843, 0.0
      %872 = vadd.xlane.f32.xlu0 %v871
      %v873 = vpop.xlane.xlu0 %872
      %v874 = vsel %vm783, %v845, 0.0
      %875 = vadd.xlane.f32.xlu0 %v874
      %v876 = vpop.xlane.xlu0 %875
      %v877 = vsel %vm783, %v847, 0.0
      %878 = vadd.xlane.f32.xlu0 %v877
      %v879 = vpop.xlane.xlu0 %878
      %v880 = vsel %vm783, %v849, 0.0
      %881 = vadd.xlane.f32.xlu0 %v880
      %v882 = vpop.xlane.xlu0 %881
      %v883 = vsel %vm783, %v851, 0.0
      %884 = vadd.xlane.f32.xlu0 %v883
      %v885 = vpop.xlane.xlu0 %884
      %v886 = vsel %vm783, %v853, 0.0
      %887 = vadd.xlane.f32.xlu0 %v886
      %v888 = vpop.xlane.xlu0 %887
      %v889 = vsel %vm783, %v855, 0.0
      %890 = vadd.xlane.f32.xlu0 %v889
      %v891 = vpop.xlane.xlu0 %890
      %v892 = vrcp.pop %v858
      %v893 = vrcp.pop %v861
      %v894 = vrcp.pop %v864
      %v895 = vrcp.pop %v867
      %v896 = vrcp.pop %v870
      %v897 = vrcp.pop %v873
      %v898 = vrcp.pop %v876
      %v899 = vrcp.pop %v879
      %v900 = vrcp.pop %v882
      %v901 = vrcp.pop %v885
      %v902 = vrcp.pop %v888
      %v903 = vrcp.pop %v891
      %v904 = vmul.f32 %v833, %v892
      %v905 = vmul.f32 %v835, %v893
      %v906 = vmul.f32 %v837, %v894
      %v907 = vmul.f32 %v839, %v895
      %v908 = vmul.f32 %v841, %v896
      %v909 = vmul.f32 %v843, %v897
      %v910 = vmul.f32 %v845, %v898
      %v911 = vmul.f32 %v847, %v899
      %v912 = vmul.f32 %v849, %v900
      %v913 = vmul.f32 %v851, %v901
      %v914 = vmul.f32 %v853, %v902
      %v915 = vmul.f32 %v855, %v903
      %v916 = vpack.c.bf16 %v905, %v904
      %v917 = vpack.c.bf16 %v906, %v906
      %v918 = vpack.c.bf16 %v908, %v907
      %v919 = vpack.c.bf16 %v909, %v909
      %v920 = vpack.c.bf16 %v911, %v910
      %v921 = vpack.c.bf16 %v912, %v912
      %v922 = vpack.c.bf16 %v914, %v913
      %v923 = vpack.c.bf16 %v915, %v915
      %924 = vrot.lane.b32.xlu0 %v539, 64
      %v925 = vpop.permute.xlu0 %924
      %v927 = vsel %vm783, %v916, 0
      %v930 = vsel %vm783, %v917, 0
      %vm932 = vcmask 1041408
      %v934 = vsel %vm932, %v925, 0
      %936 = vmatprep.subr.bf16.mxu0 0
      %937 = vmatpush1.bf16.msra.mxu0 %v934
      %938 = vmatprep.subr.bf16.mxu0 0
      %939 = vmatpush1.bf16.msra.mxu0 0
      %940 = vmatprep.subr.bf16.mxu0 0
      %941 = vmatpush1.bf16.msra.mxu0 0
      %942 = vmatprep.subr.bf16.mxu0 0
      %943 = vmatpush1.bf16.msra.mxu0 0
      %944 = vmatprep.subr.bf16.mxu0 0
      %945 = vmatpush1.bf16.msra.mxu0 0
      %946 = vmatprep.subr.bf16.mxu0 0
      %947 = vmatpush1.bf16.msra.mxu0 0
      %948 = vmatprep.subr.bf16.mxu0 0
      %949 = vmatpush1.bf16.msra.mxu0 0
      %950 = vmatprep.subr.bf16.mxu0 0
      %951 = vmatpush1.bf16.msra.mxu0 0
      %952 = vmatprep.subr.bf16.mxu0 0
      %953 = vmatpush1.bf16.msra.mxu0 0
      %954 = vmatprep.subr.bf16.mxu0 0
      %955 = vmatpush1.bf16.msra.mxu0 0
      %956 = vmatprep.subr.bf16.mxu0 0
      %957 = vmatpush1.bf16.msra.mxu0 0
      %958 = vmatprep.subr.bf16.mxu0 0
      %959 = vmatpush1.bf16.msra.mxu0 0
      %960 = vmatprep.subr.bf16.mxu0 0
      %961 = vmatpush1.bf16.msra.mxu0 0
      %962 = vmatprep.subr.bf16.mxu0 0
      %963 = vmatpush1.bf16.msra.mxu0 0
      %964 = vmatprep.subr.bf16.mxu0 0
      %965 = vmatpush1.bf16.msra.mxu0 0
      %966 = vmatprep.subr.bf16.mxu0 0
      %967 = vmatpush1.bf16.msra.mxu0 0
      %968 = vmatprep.mubr.bf16.mxu0 0
      %969 = vmatmul.mubr.bf16.gmra.mrb[0].mxu0 %v927
      %v970 = vpop.f32.mrb[0].mxu0
      %v971 = vadd.f32 0.0, %v970
      %v972 = vpop.f32.mrb[0].mxu0
      %v973 = vpop.f32.mrb[0].mxu0
      %v974 = vadd.f32 0.0, %v973
      %v975 = vpop.f32.mrb[0].mxu0
      %976 = vmatprep.mubr.bf16.mxu0 0
      %977 = vmatmul.mubr.bf16.gmra.mrb[0].mxu0 %v930
      %v978 = vpop.f32.mrb[0].mxu0
      %v979 = vadd.f32 0.0, %v978
      %v980 = vpop.f32.mrb[0].mxu0
      %v981 = vpop.f32.mrb[0].mxu0
      %v982 = vpop.f32.mrb[0].mxu0
      %983 = vdwg.mxu0
      %984 = vrot.lane.b32.xlu0 %v540, 64
      %v985 = vpop.permute.xlu0 %984
      %v987 = vsel %vm783, %v918, 0
      %v990 = vsel %vm783, %v919, 0
      %v993 = vsel %vm932, %v985, 0
      %995 = vmatprep.subr.bf16.mxu0 0
      %996 = vmatpush1.bf16.msra.mxu0 %v993
      %997 = vmatprep.subr.bf16.mxu0 0
      %998 = vmatpush1.bf16.msra.mxu0 0
      %999 = vmatprep.subr.bf16.mxu0 0
      %1000 = vmatpush1.bf16.msra.mxu0 0
      %1001 = vmatprep.subr.bf16.mxu0 0
      %1002 = vmatpush1.bf16.msra.mxu0 0
      %1003 = vmatprep.subr.bf16.mxu0 0
      %1004 = vmatpush1.bf16.msra.mxu0 0
      %1005 = vmatprep.subr.bf16.mxu0 0
      %1006 = vmatpush1.bf16.msra.mxu0 0
      %1007 = vmatprep.subr.bf16.mxu0 0
      %1008 = vmatpush1.bf16.msra.mxu0 0
      %1009 = vmatprep.subr.bf16.mxu0 0
      %1010 = vmatpush1.bf16.msra.mxu0 0
      %1011 = vmatprep.subr.bf16.mxu0 0
      %1012 = vmatpush1.bf16.msra.mxu0 0
      %1013 = vmatprep.subr.bf16.mxu0 0
      %1014 = vmatpush1.bf16.msra.mxu0 0
      %1015 = vmatprep.subr.bf16.mxu0 0
      %1016 = vmatpush1.bf16.msra.mxu0 0
      %1017 = vmatprep.subr.bf16.mxu0 0
      %1018 = vmatpush1.bf16.msra.mxu0 0
      %1019 = vmatprep.subr.bf16.mxu0 0
      %1020 = vmatpush1.bf16.msra.mxu0 0
      %1021 = vmatprep.subr.bf16.mxu0 0
      %1022 = vmatpush1.bf16.msra.mxu0 0
      %1023 = vmatprep.subr.bf16.mxu0 0
      %1024 = vmatpush1.bf16.msra.mxu0 0
      %1025 = vmatprep.subr.bf16.mxu0 0
      %1026 = vmatpush1.bf16.msra.mxu0 0
      %1027 = vmatprep.mubr.bf16.mxu0 0
      %1028 = vmatmul.mubr.bf16.gmra.mrb[0].mxu0 %v987
      %v1029 = vpop.f32.mrb[0].mxu0
      %v1030 = vadd.f32 0.0, %v1029
      %v1031 = vpop.f32.mrb[0].mxu0
      %v1032 = vpop.f32.mrb[0].mxu0
      %v1033 = vadd.f32 0.0, %v1032
      %v1034 = vpop.f32.mrb[0].mxu0
      %1035 = vmatprep.mubr.bf16.mxu0 0
      %1036 = vmatmul.mubr.bf16.gmra.mrb[0].mxu0 %v990
      %v1037 = vpop.f32.mrb[0].mxu0
      %v1038 = vadd.f32 0.0, %v1037
      %v1039 = vpop.f32.mrb[0].mxu0
      %v1040 = vpop.f32.mrb[0].mxu0
      %v1041 = vpop.f32.mrb[0].mxu0
      %1042 = vdwg.mxu0
      %1043 = vrot.lane.b32.xlu0 %v541, 64
      %v1044 = vpop.permute.xlu0 %1043
      %v1046 = vsel %vm783, %v920, 0
      %v1049 = vsel %vm783, %v921, 0
      %v1052 = vsel %vm932, %v1044, 0
      %1054 = vmatprep.subr.bf16.mxu0 0
      %1055 = vmatpush1.bf16.msra.mxu0 %v1052
      %1056 = vmatprep.subr.bf16.mxu0 0
      %1057 = vmatpush1.bf16.msra.mxu0 0
      %1058 = vmatprep.subr.bf16.mxu0 0
      %1059 = vmatpush1.bf16.msra.mxu0 0
      %1060 = vmatprep.subr.bf16.mxu0 0
      %1061 = vmatpush1.bf16.msra.mxu0 0
      %1062 = vmatprep.subr.bf16.mxu0 0
      %1063 = vmatpush1.bf16.msra.mxu0 0
      %1064 = vmatprep.subr.bf16.mxu0 0
      %1065 = vmatpush1.bf16.msra.mxu0 0
      %1066 = vmatprep.subr.bf16.mxu0 0
      %1067 = vmatpush1.bf16.msra.mxu0 0
      %1068 = vmatprep.subr.bf16.mxu0 0
      %1069 = vmatpush1.bf16.msra.mxu0 0
      %1070 = vmatprep.subr.bf16.mxu0 0
      %1071 = vmatpush1.bf16.msra.mxu0 0
      %1072 = vmatprep.subr.bf16.mxu0 0
      %1073 = vmatpush1.bf16.msra.mxu0 0
      %1074 = vmatprep.subr.bf16.mxu0 0
      %1075 = vmatpush1.bf16.msra.mxu0 0
      %1076 = vmatprep.subr.bf16.mxu0 0
      %1077 = vmatpush1.bf16.msra.mxu0 0
      %1078 = vmatprep.subr.bf16.mxu0 0
      %1079 = vmatpush1.bf16.msra.mxu0 0
      %1080 = vmatprep.subr.bf16.mxu0 0
      %1081 = vmatpush1.bf16.msra.mxu0 0
      %1082 = vmatprep.subr.bf16.mxu0 0
      %1083 = vmatpush1.bf16.msra.mxu0 0
      %1084 = vmatprep.subr.bf16.mxu0 0
      %1085 = vmatpush1.bf16.msra.mxu0 0
      %1086 = vmatprep.mubr.bf16.mxu0 0
      %1087 = vmatmul.mubr.bf16.gmra.mrb[0].mxu0 %v1046
      %v1088 = vpop.f32.mrb[0].mxu0
      %v1089 = vadd.f32 0.0, %v1088
      %v1090 = vpop.f32.mrb[0].mxu0
      %v1091 = vpop.f32.mrb[0].mxu0
      %v1092 = vadd.f32 0.0, %v1091
      %v1093 = vpop.f32.mrb[0].mxu0
      %1094 = vmatprep.mubr.bf16.mxu0 0
      %1095 = vmatmul.mubr.bf16.gmra.mrb[0].mxu0 %v1049
      %v1096 = vpop.f32.mrb[0].mxu0
      %v1097 = vadd.f32 0.0, %v1096
      %v1098 = vpop.f32.mrb[0].mxu0
      %v1099 = vpop.f32.mrb[0].mxu0
      %v1100 = vpop.f32.mrb[0].mxu0
      %1101 = vdwg.mxu0
      %1102 = vrot.lane.b32.xlu0 %v542, 64
      %v1103 = vpop.permute.xlu0 %1102
      %v1105 = vsel %vm783, %v922, 0
      %v1108 = vsel %vm783, %v923, 0
      %v1111 = vsel %vm932, %v1103, 0
      %1113 = vmatprep.subr.bf16.mxu0 0
      %1114 = vmatpush1.bf16.msra.mxu0 %v1111
      %1115 = vmatprep.subr.bf16.mxu0 0
      %1116 = vmatpush1.bf16.msra.mxu0 0
      %1117 = vmatprep.subr.bf16.mxu0 0
      %1118 = vmatpush1.bf16.msra.mxu0 0
      %1119 = vmatprep.subr.bf16.mxu0 0
      %1120 = vmatpush1.bf16.msra.mxu0 0
      %1121 = vmatprep.subr.bf16.mxu0 0
      %1122 = vmatpush1.bf16.msra.mxu0 0
      %1123 = vmatprep.subr.bf16.mxu0 0
      %1124 = vmatpush1.bf16.msra.mxu0 0
      %1125 = vmatprep.subr.bf16.mxu0 0
      %1126 = vmatpush1.bf16.msra.mxu0 0
      %1127 = vmatprep.subr.bf16.mxu0 0
      %1128 = vmatpush1.bf16.msra.mxu0 0
      %1129 = vmatprep.subr.bf16.mxu0 0
      %1130 = vmatpush1.bf16.msra.mxu0 0
      %1131 = vmatprep.subr.bf16.mxu0 0
      %1132 = vmatpush1.bf16.msra.mxu0 0
      %1133 = vmatprep.subr.bf16.mxu0 0
      %1134 = vmatpush1.bf16.msra.mxu0 0
      %1135 = vmatprep.subr.bf16.mxu0 0
      %1136 = vmatpush1.bf16.msra.mxu0 0
      %1137 = vmatprep.subr.bf16.mxu0 0
      %1138 = vmatpush1.bf16.msra.mxu0 0
      %1139 = vmatprep.subr.bf16.mxu0 0
      %1140 = vmatpush1.bf16.msra.mxu0 0
      %1141 = vmatprep.subr.bf16.mxu0 0
      %1142 = vmatpush1.bf16.msra.mxu0 0
      %1143 = vmatprep.subr.bf16.mxu0 0
      %1144 = vmatpush1.bf16.msra.mxu0 0
      %1145 = vmatprep.mubr.bf16.mxu0 0
      %1146 = vmatmul.mubr.bf16.gmra.mrb[0].mxu0 %v1105
      %v1147 = vpop.f32.mrb[0].mxu0
      %v1148 = vadd.f32 0.0, %v1147
      %v1149 = vpop.f32.mrb[0].mxu0
      %v1150 = vpop.f32.mrb[0].mxu0
      %v1151 = vadd.f32 0.0, %v1150
      %v1152 = vpop.f32.mrb[0].mxu0
      %1153 = vmatprep.mubr.bf16.mxu0 0
      %1154 = vmatmul.mubr.bf16.gmra.mrb[0].mxu0 %v1108
      %v1155 = vpop.f32.mrb[0].mxu0
      %v1156 = vadd.f32 0.0, %v1155
      %v1157 = vpop.f32.mrb[0].mxu0
      %v1158 = vpop.f32.mrb[0].mxu0
      %v1159 = vpop.f32.mrb[0].mxu0
      %1160 = vdwg.mxu0
      %v1161 = vld [vmem:[%s1 + $0x28] sm:$0xf]
      %v1162 = vld [vmem:[%s1 + $0x2c] sm:$0xf]
      %v1163 = vld [vmem:[%s1 + $0x30] sm:$0xf]
      %v1164 = vld [vmem:[%s1 + $0x34] sm:$0xf]
      %v1165 = vpack.c.bf16 %v974, %v971
      %v1166 = vpack.c.bf16 %v1030, %v979
      %v1167 = vpack.c.bf16 %v1038, %v1033
      %v1168 = vpack.c.bf16 %v1092, %v1089
      %v1169 = vpack.c.bf16 %v1148, %v1097
      %v1170 = vpack.c.bf16 %v1156, %v1151
      %v1171 = vld [vmem:[%s2 + $0x1] sm:$0x1]
      %v1172 = vlaneseq
      %v1173 = vshrl.u32 %v1172, 7
      %v1174 = vsub.s32 0, %v1173
      %v1175 = vrot.slane %v1171, %v1174
      %v1180 = vunpack.c.l.b16 %v1161
      %v1181 = vunpack.c.l.b16 %v1162
      %v1182 = vunpack.c.l.b16 %v1163
      %v1183 = vunpack.c.l.b16 %v1164
      %v1184 = vpack.c.b16 %v1181, %v1180
      %v1185 = vpack.c.b16 %v1183, %v1182
      %v1189 = vsel %vm411, %v1165, 0
      %v1192 = vsel %vm411, %v1166, 0
      %v1195 = vsel %vm411, %v1167, 0
      %v1198 = vsel %vm411, %v1168, 0
      %v1201 = vsel %vm411, %v1169, 0
      %v1204 = vsel %vm411, %v1170, 0
      %1206 = vmatprep.subr.bf16.mxu0 0
      %1207 = vmatpush1.bf16.msra.mxu0 %v1184
      %1208 = vmatprep.subr.bf16.mxu0 0
      %1209 = vmatpush1.bf16.msra.mxu0 %v1185
      %1210 = vmatprep.subr.bf16.mxu0 0
      %1211 = vmatpush1.bf16.msra.mxu0 0
      %1212 = vmatprep.subr.bf16.mxu0 0
      %1213 = vmatpush1.bf16.msra.mxu0 0
      %1214 = vmatprep.subr.bf16.mxu0 0
      %1215 = vmatpush1.bf16.msra.mxu0 0
      %1216 = vmatprep.subr.bf16.mxu0 0
      %1217 = vmatpush1.bf16.msra.mxu0 0
      %1218 = vmatprep.subr.bf16.mxu0 0
      %1219 = vmatpush1.bf16.msra.mxu0 0
      %1220 = vmatprep.subr.bf16.mxu0 0
      %1221 = vmatpush1.bf16.msra.mxu0 0
      %1222 = vmatprep.subr.bf16.mxu0 0
      %1223 = vmatpush1.bf16.msra.mxu0 0
      %1224 = vmatprep.subr.bf16.mxu0 0
      %1225 = vmatpush1.bf16.msra.mxu0 0
      %1226 = vmatprep.subr.bf16.mxu0 0
      %1227 = vmatpush1.bf16.msra.mxu0 0
      %1228 = vmatprep.subr.bf16.mxu0 0
      %1229 = vmatpush1.bf16.msra.mxu0 0
      %1230 = vmatprep.subr.bf16.mxu0 0
      %1231 = vmatpush1.bf16.msra.mxu0 0
      %1232 = vmatprep.subr.bf16.mxu0 0
      %1233 = vmatpush1.bf16.msra.mxu0 0
      %1234 = vmatprep.subr.bf16.mxu0 0
      %1235 = vmatpush1.bf16.msra.mxu0 0
      %1236 = vmatprep.subr.bf16.mxu0 0
      %1237 = vmatpush1.bf16.msra.mxu0 0
      %1238 = vmatprep.mubr.bf16.mxu0 0
      %1239 = vmatmul.mubr.bf16.gmra.mrb[0].mxu0 %v1189
      %v1240 = vpop.f32.mrb[0].mxu0
      %v1241 = vadd.f32 %v1175, %v1240
      %v1242 = vpop.f32.mrb[0].mxu0
      %v1243 = vpop.f32.mrb[0].mxu0
      %v1244 = vadd.f32 %v1175, %v1243
      %v1245 = vpop.f32.mrb[0].mxu0
      %1246 = vmatprep.mubr.bf16.mxu0 0
      %1247 = vmatmul.mubr.bf16.gmra.mrb[0].mxu0 %v1192
      %v1248 = vpop.f32.mrb[0].mxu0
      %v1249 = vadd.f32 %v1175, %v1248
      %v1250 = vpop.f32.mrb[0].mxu0
      %v1251 = vpop.f32.mrb[0].mxu0
      %v1252 = vadd.f32 %v1175, %v1251
      %v1253 = vpop.f32.mrb[0].mxu0
      %1254 = vmatprep.mubr.bf16.mxu0 0
      %1255 = vmatmul.mubr.bf16.gmra.mrb[0].mxu0 %v1195
      %v1256 = vpop.f32.mrb[0].mxu0
      %v1257 = vadd.f32 %v1175, %v1256
      %v1258 = vpop.f32.mrb[0].mxu0
      %v1259 = vpop.f32.mrb[0].mxu0
      %v1260 = vadd.f32 %v1175, %v1259
      %v1261 = vpop.f32.mrb[0].mxu0
      %1262 = vmatprep.mubr.bf16.mxu0 0
      %1263 = vmatmul.mubr.bf16.gmra.mrb[0].mxu0 %v1198
      %v1264 = vpop.f32.mrb[0].mxu0
      %v1265 = vadd.f32 %v1175, %v1264
      %v1266 = vpop.f32.mrb[0].mxu0
      %v1267 = vpop.f32.mrb[0].mxu0
      %v1268 = vadd.f32 %v1175, %v1267
      %v1269 = vpop.f32.mrb[0].mxu0
      %1270 = vmatprep.mubr.bf16.mxu0 0
      %1271 = vmatmul.mubr.bf16.gmra.mrb[0].mxu0 %v1201
      %v1272 = vpop.f32.mrb[0].mxu0
      %v1273 = vadd.f32 %v1175, %v1272
      %v1274 = vpop.f32.mrb[0].mxu0
      %v1275 = vpop.f32.mrb[0].mxu0
      %v1276 = vadd.f32 %v1175, %v1275
      %v1277 = vpop.f32.mrb[0].mxu0
      %1278 = vmatprep.mubr.bf16.mxu0 0
      %1279 = vmatmul.mubr.bf16.gmra.mrb[0].mxu0 %v1204
      %v1280 = vpop.f32.mrb[0].mxu0
      %v1281 = vadd.f32 %v1175, %v1280
      %v1282 = vpop.f32.mrb[0].mxu0
      %v1283 = vpop.f32.mrb[0].mxu0
      %v1284 = vadd.f32 %v1175, %v1283
      %v1285 = vpop.f32.mrb[0].mxu0
      %1286 = vdwg.mxu0
      %v1287 = vadd.f32 %v1241, %v372
      %v1288 = vadd.f32 %v1244, %v373
      %v1289 = vadd.f32 %v1249, %v374
      %v1290 = vadd.f32 %v1252, %v375
      %v1291 = vadd.f32 %v1257, %v376
      %v1292 = vadd.f32 %v1260, %v377
      %v1293 = vadd.f32 %v1265, %v378
      %v1294 = vadd.f32 %v1268, %v379
      %v1295 = vadd.f32 %v1273, %v380
      %v1296 = vadd.f32 %v1276, %v381
      %v1297 = vadd.f32 %v1281, %v382
      %v1298 = vadd.f32 %v1284, %v383
      %v1299 = vmax.f32 %v1287, 0.0
      %v1300 = vmax.f32 %v1288, 0.0
      %v1301 = vmax.f32 %v1289, 0.0
      %v1302 = vmax.f32 %v1290, 0.0
      %v1303 = vmax.f32 %v1291, 0.0
      %v1304 = vmax.f32 %v1292, 0.0
      %v1305 = vmax.f32 %v1293, 0.0
      %v1306 = vmax.f32 %v1294, 0.0
      %v1307 = vmax.f32 %v1295, 0.0
      %v1308 = vmax.f32 %v1296, 0.0
      %v1309 = vmax.f32 %v1297, 0.0
      %v1310 = vmax.f32 %v1298, 0.0
      %v1311 = vsel %vm411, %v1299, -inf
      %v1312 = vsel %vm411, %v1300, -inf
      %v1313 = vmax.f32 %v1311, %v1312
      %v1314 = vsel %vm411, %v1301, -inf
      %v1315 = vmax.f32 %v1313, %v1314
      %v1316 = vrot.slane %v1315, 4
      %v1317 = vmax.f32 %v1315, %v1316
      %v1318 = vrot.slane %v1317, 2
      %v1319 = vmax.f32 %v1317, %v1318
      %v1320 = vrot.slane %v1319, 1
      %v1321 = vmax.f32 %v1319, %v1320
      %v1322 = vsel %vm411, %v1302, -inf
      %v1323 = vsel %vm411, %v1303, -inf
      %v1324 = vmax.f32 %v1322, %v1323
      %v1325 = vsel %vm411, %v1304, -inf
      %v1326 = vmax.f32 %v1324, %v1325
      %v1327 = vrot.slane %v1326, 4
      %v1328 = vmax.f32 %v1326, %v1327
      %v1329 = vrot.slane %v1328, 2
      %v1330 = vmax.f32 %v1328, %v1329
      %v1331 = vrot.slane %v1330, 1
      %v1332 = vmax.f32 %v1330, %v1331
      %v1333 = vsel %vm411, %v1305, -inf
      %v1334 = vsel %vm411, %v1306, -inf
      %v1335 = vmax.f32 %v1333, %v1334
      %v1336 = vsel %vm411, %v1307, -inf
      %v1337 = vmax.f32 %v1335, %v1336
      %v1338 = vrot.slane %v1337, 4
      %v1339 = vmax.f32 %v1337, %v1338
      %v1340 = vrot.slane %v1339, 2
      %v1341 = vmax.f32 %v1339, %v1340
      %v1342 = vrot.slane %v1341, 1
      %v1343 = vmax.f32 %v1341, %v1342
      %v1344 = vsel %vm411, %v1308, -inf
      %v1345 = vsel %vm411, %v1309, -inf
      %v1346 = vmax.f32 %v1344, %v1345
      %v1347 = vsel %vm411, %v1310, -inf
      %v1348 = vmax.f32 %v1346, %v1347
      %v1349 = vrot.slane %v1348, 4
      %v1350 = vmax.f32 %v1348, %v1349
      %v1351 = vrot.slane %v1350, 2
      %v1352 = vmax.f32 %v1350, %v1351
      %v1353 = vrot.slane %v1352, 1
      %v1354 = vmax.f32 %v1352, %v1353
      %v1355 = vld [vmem:[%s1 + $0x38] sm:$0xf]
      %v1356 = vld [vmem:[%s1 + $0x3c] sm:$0xf]
      %v1357 = vld [vmem:[%s1 + $0x40] sm:$0xf]
      %v1358 = vld [vmem:[%s1 + $0x44] sm:$0xf]
      %v1359 = vpack.c.bf16 %v1321, %v1321
      %v1360 = vpack.c.bf16 %v1332, %v1332
      %v1361 = vpack.c.bf16 %v1343, %v1343
      %v1362 = vpack.c.bf16 %v1354, %v1354
      %v1363 = vld [vmem:[%s2 + $0x2] sm:$0x1]
      %v1364 = vlaneseq
      %v1365 = vshrl.u32 %v1364, 7
      %v1366 = vsub.s32 0, %v1365
      %v1367 = vrot.slane %v1363, %v1366
      %v1372 = vunpack.c.l.b16 %v1359
      %v1373 = vunpack.c.l.b16 %v1360
      %v1374 = vunpack.c.l.b16 %v1361
      %v1375 = vunpack.c.l.b16 %v1362
      %vm1376 = vcmask 1041409
      %v1377 = vsel %vm1376, %v1373, %v1372
      %vm1378 = vcmask 1042434
      %v1379 = vsel %vm1378, %v1374, %v1377
      %vm1380 = vcmask 1043459
      %v1381 = vsel %vm1380, %v1375, %v1379
      %v1382 = vpack.c.b16 %v1381, %v1381
      %v1387 = vunpack.c.l.b16 %v1355
      %v1388 = vunpack.c.l.b16 %v1356
      %v1389 = vunpack.c.l.b16 %v1357
      %v1390 = vunpack.c.l.b16 %v1358
      %v1391 = vpack.c.b16 %v1388, %v1387
      %v1392 = vpack.c.b16 %v1390, %v1389
      %v1396 = vsel %vm411, %v1382, 0
      %1398 = vmatprep.subr.bf16.mxu0 0
      %1399 = vmatpush1.bf16.msra.mxu0 %v1391
      %1400 = vmatprep.subr.bf16.mxu0 0
      %1401 = vmatpush1.bf16.msra.mxu0 %v1392
      %1402 = vmatprep.subr.bf16.mxu0 0
      %1403 = vmatpush1.bf16.msra.mxu0 0
      %1404 = vmatprep.subr.bf16.mxu0 0
      %1405 = vmatpush1.bf16.msra.mxu0 0
      %1406 = vmatprep.subr.bf16.mxu0 0
      %1407 = vmatpush1.bf16.msra.mxu0 0
      %1408 = vmatprep.subr.bf16.mxu0 0
      %1409 = vmatpush1.bf16.msra.mxu0 0
      %1410 = vmatprep.subr.bf16.mxu0 0
      %1411 = vmatpush1.bf16.msra.mxu0 0
      %1412 = vmatprep.subr.bf16.mxu0 0
      %1413 = vmatpush1.bf16.msra.mxu0 0
      %1414 = vmatprep.subr.bf16.mxu0 0
      %1415 = vmatpush1.bf16.msra.mxu0 0
      %1416 = vmatprep.subr.bf16.mxu0 0
      %1417 = vmatpush1.bf16.msra.mxu0 0
      %1418 = vmatprep.subr.bf16.mxu0 0
      %1419 = vmatpush1.bf16.msra.mxu0 0
      %1420 = vmatprep.subr.bf16.mxu0 0
      %1421 = vmatpush1.bf16.msra.mxu0 0
      %1422 = vmatprep.subr.bf16.mxu0 0
      %1423 = vmatpush1.bf16.msra.mxu0 0
      %1424 = vmatprep.subr.bf16.mxu0 0
      %1425 = vmatpush1.bf16.msra.mxu0 0
      %1426 = vmatprep.subr.bf16.mxu0 0
      %1427 = vmatpush1.bf16.msra.mxu0 0
      %1428 = vmatprep.subr.bf16.mxu0 0
      %1429 = vmatpush1.bf16.msra.mxu0 0
      %1430 = vmatprep.mubr.bf16.mxu0 0
      %1431 = vmatmul.mubr.bf16.gmra.mrb[0].mxu0 %v1396
      %v1432 = vpop.f32.mrb[0].mxu0
      %v1433 = vadd.f32 %v1367, %v1432
      %v1434 = vpop.f32.mrb[0].mxu0
      %v1435 = vpop.f32.mrb[0].mxu0
      %v1436 = vpop.f32.mrb[0].mxu0
      %1437 = vdwg.mxu0
      %1439 = vset.pattern.permute.xlu0 0
      %1440 = vperm.xlu0 %1439, %v1433
      %v1441 = vpop.permute.xlu0 %1440
      %1443 = vst [vmem:[%s168] sm:$0xf] %v1441
      %p1444 = scmp.lt.s32.totalorder %s14, 1
      %s1445 = scalar_select %p1444, %s14, 1
      %s1446 = smul.addr %s1445, 4
      %s1447 = scalar_lea.vmem %s3, %s1446
      // Predicated region
      $region33: #{msfn_forward.1} parent=31 // pred_check
        %p1448 = pneg %p100
      $region34: #{msfn_forward.1} parent=31 // pred_check_branch
        %1450 = sbr.rel (%p1448) target = $region36
      $region35: #{msfn_forward.1} parent=31 // pred_region
        _
      $region36: #{msfn_forward.1} parent=31 // pred_fallthru
        _
    $region32: #{msfn_forward.1} parent=5 // pred_fallthru
      _
    %p1451 = scmp.le.s32.totalorder 2, %s9
    // Predicated region
    $region37: #{msfn_forward.1} parent=5 // pred_check
      %p1452 = pneg %p1451
    $region38: #{msfn_forward.1} parent=5 // pred_check_branch
      %1454 = sbr.rel (%p1452) target = $region40
    $region39: #{msfn_forward.1} parent=5 // pred_region
      %s1455 = ssub.s32 %s9, 2
      // Predicated region
      $region41: #{msfn_forward.1} parent=39 // pred_check
        %p1456 = pneg %p106
      $region42: #{msfn_forward.1} parent=39 // pred_check_branch
        %1458 = sbr.rel (%p1456) target = $region44
      $region43: #{msfn_forward.1} parent=39 // pred_region
        %p1459 = scmp.lt.s32.totalorder %s15, 1
        %s1460 = scalar_select %p1459, %s15, 1
        %s1461 = smul.addr %s1460, 4
        %s1462 = scalar_lea.vmem %s3, %s1461
      $region44: #{msfn_forward.1} parent=39 // pred_fallthru
        _
    $region40: #{msfn_forward.1} parent=5 // pred_fallthru
      _
  $region6: #{msfn_forward.1} parent=0 // loop_footer
    %s13 = sadd.s32 1, %s9
  $region7: #{msfn_forward.1} parent=0 // loop_footer_branch
    %8 = sbr.rel target = $region3
  $region8: #{msfn_forward.1} parent=0 // loop_exit
    _

</llo_original>
